<compile_context>
chip_gen: v6e
topology: v6e:2x2x1
jax: 0.10.0
libtpu: 0.0.40
codegen_flags: <defaults>
</compile_context>

<pallas_src>
import math

import jax
import jax.numpy as jnp
from jax.experimental import pallas as pl
from jax.experimental.pallas import tpu as pltpu

ALPHA = 0.1          # cfg.MODEL.HEADS.ALPHA (MadaCosLayer default)
TRAINING = True      # nn.Module default mode
LOG_CONST = math.log(9999999.0 * (1.0 - ALPHA) / ALPHA)


def _round_up(n, m):
    return ((n + m - 1) // m) * m


def _pick_tile(n, candidates):
    for c in candidates:
        if n % c == 0:
            return c
    return n


# ---------------------------------------------------------------------------
# Kernel A: row-wise L2 normalize + cast to bf16 (features).
# ---------------------------------------------------------------------------
def _l2norm_rows_kernel(x_ref, out_ref):
    x = x_ref[...]                                            # (tr, Dp) f32
    sumsq = jnp.sum(x * x, axis=1, keepdims=True)
    inv = jax.lax.rsqrt(jnp.maximum(sumsq, 1e-24))            # EUP rsqrt + VPU mul
    out_ref[...] = (x * inv).astype(out_ref.dtype)


def _l2norm_rows(x, tile_rows, out_dtype):
    n, d = x.shape
    return pl.pallas_call(
        _l2norm_rows_kernel,
        out_shape=jax.ShapeDtypeStruct((n, d), out_dtype),
        grid=(n // tile_rows,),
        in_specs=[pl.BlockSpec((tile_rows, d), lambda i: (i, 0))],
        out_specs=pl.BlockSpec((tile_rows, d), lambda i: (i, 0)),
        compiler_params=pltpu.CompilerParams(dimension_semantics=("parallel",)),
    )(x)


# ---------------------------------------------------------------------------
# Kernel A': row-wise L2 normalize the weight AND emit it transposed (D, C)
# so Kernel B's matmul needs no per-tile rhs transpose and no XLA layout pass.
# ---------------------------------------------------------------------------
def _l2norm_rows_t_kernel(w_ref, out_ref):
    w = w_ref[...]                                            # (tc, Dp) f32
    sumsq = jnp.sum(w * w, axis=1, keepdims=True)
    inv = jax.lax.rsqrt(jnp.maximum(sumsq, 1e-24))
    out_ref[...] = (w * inv).T.astype(out_ref.dtype)          # (Dp, tc) bf16, XLU transpose


def _l2norm_rows_t(w, tile_rows, out_dtype):
    c, d = w.shape
    return pl.pallas_call(
        _l2norm_rows_t_kernel,
        out_shape=jax.ShapeDtypeStruct((d, c), out_dtype),
        grid=(c // tile_rows,),
        in_specs=[pl.BlockSpec((tile_rows, d), lambda i: (i, 0))],
        out_specs=pl.BlockSpec((d, tile_rows), lambda i: (0, i)),
        compiler_params=pltpu.CompilerParams(dimension_semantics=("parallel",)),
    )(w)


# ---------------------------------------------------------------------------
# Kernel B: cos_theta = norm(x) @ norm(w).T (bf16 MXU, f32 acc, K-tiled over D)
# fused with target-logit extraction (f32 scratch, stored once at last C tile).
# Grid: (i over B tiles [parallel], j over C tiles, k over D tiles [innermost]).
# ---------------------------------------------------------------------------
def _cos_tl_kernel(labels_ref, xn_ref, wn_ref, cos_ref, tl_ref, acc_ref, tl_acc_ref):
    j = pl.program_id(1)
    k = pl.program_id(2)
    nj = pl.num_programs(1)
    nk = pl.num_programs(2)

    @pl.when(k == 0)
    def _():
        acc_ref[...] = jnp.zeros_like(acc_ref)

    acc_ref[...] += jnp.dot(xn_ref[...], wn_ref[...],
                            preferred_element_type=jnp.float32)   # (tm, tn) f32

    @pl.when(k == nk - 1)
    def _():
        cos = acc_ref[...]                                        # f32
        cos_ref[...] = cos.astype(cos_ref.dtype)                  # bf16 writeback

        tn = cos.shape[1]
        class_ids = jax.lax.broadcasted_iota(jnp.int32, cos.shape, 1) + j * tn
        onehot = class_ids == labels_ref[...]                     # (tm, tn) bool

        @pl.when(j == 0)
        def _():
            tl_acc_ref[...] = jnp.zeros_like(tl_acc_ref)

        tl_acc_ref[...] += jnp.sum(jnp.where(onehot, cos, 0.0), axis=1,
                                   keepdims=True)

        @pl.when(j == nj - 1)
        def _():
            tl_ref[...] = tl_acc_ref[...]


# ---------------------------------------------------------------------------
# Kernel C: elementwise scaled / margin-shifted logits.
#   scalars_ref (SMEM, (2,) f32) = [scale, scale * margin]
# ---------------------------------------------------------------------------
def _logits_kernel(scalars_ref, labels_ref, cos_ref, out_ref):
    scale = scalars_ref[0]
    shift = scalars_ref[1]
    j = pl.program_id(1)

    cos = cos_ref[...].astype(jnp.float32)                        # bf16 -> f32
    tn = cos.shape[1]
    class_ids = jax.lax.broadcasted_iota(jnp.int32, cos.shape, 1) + j * tn
    onehot = class_ids == labels_ref[...]

    scaled = cos * scale
    out_ref[...] = jnp.where(onehot, scaled - shift, scaled)


# ---------------------------------------------------------------------------
# Forward
# ---------------------------------------------------------------------------
@jax.jit
def madacos_forward(features, targets, weight):
    B, D = features.shape
    C = weight.shape[0]
    f32 = jnp.float32

    # Pad to lane/sublane-friendly shapes (padded rows/classes are zeroed and
    # masked out of everything that matters).  Batch padded to a multiple of
    # 128 so the MXU never sees tiny M slabs.
    Bp = _round_up(max(B, 128), 128)
    Cp = _round_up(max(C, 128), 128)
    Dp = _round_up(max(D, 128), 128)

    # MXU tile over batch; guarantee >= 2 programs on the parallel i axis so
    # v7x's second TensorCore always has work.
    if Bp % 512 == 0:
        tm = 256
    elif Bp >= 256:
        tm = 128
    else:                       # Bp == 128
        tm = 64

    tn = _pick_tile(Cp, (1024, 512, 256, 128))   # lane-dense C (MXU N) tiles
    tk = _pick_tile(Dp, (1024, 512, 256, 128))   # D (MXU K, reduction) tiles

    # Weight-normalize+transpose tile: (tc,Dp) f32 in + (Dp,tc) bf16 out,
    # double-buffered, kept well under the scoped-VMEM default on all chips.
    tc = 128
    for cand in (512, 256, 128):
        if Cp % cand == 0 and cand * Dp * (4 + 2) * 2 <= (10 << 20):
            tc = cand
            break

    # Skip pad/cast work when already aligned (no-op for pre-padded inputs).
    x = features if features.dtype == f32 else features.astype(f32)
    w = weight if weight.dtype == f32 else weight.astype(f32)
    if (Bp, Dp) != (B, D):
        x = jnp.pad(x, ((0, Bp - B), (0, Dp - D)))
    if (Cp, Dp) != (C, D):
        w = jnp.pad(w, ((0, Cp - C), (0, Dp - D)))
    targets_i = targets.astype(jnp.int32)
    labels_p = (targets_i if Bp == B else jnp.pad(targets_i, (0, Bp - B))).reshape(Bp, 1)

    # --- Kernel A / A': normalize once, emit bf16 MXU operands; weight lands
    # already transposed to (Dp, Cp). ---
    xn = _l2norm_rows(x, tm, jnp.bfloat16)                    # (Bp, Dp) bf16
    wt = _l2norm_rows_t(w, tc, jnp.bfloat16)                  # (Dp, Cp) bf16

    # --- Kernel B: cos_theta (bf16) + fused target-logit (f32), K-tiled ---
    cos, tl = pl.pallas_call(
        _cos_tl_kernel,
        out_shape=(jax.ShapeDtypeStruct((Bp, Cp), jnp.bfloat16),
                   jax.ShapeDtypeStruct((Bp, 1), jnp.float32)),
        grid=(Bp // tm, Cp // tn, Dp // tk),
        in_specs=[
            pl.BlockSpec((tm, 1), lambda i, j, k: (i, 0)),    # labels
            pl.BlockSpec((tm, tk), lambda i, j, k: (i, k)),   # normalized features
            pl.BlockSpec((tk, tn), lambda i, j, k: (k, j)),   # normalized weight (D, C)
        ],
        out_specs=[
            pl.BlockSpec((tm, tn), lambda i, j, k: (i, j)),   # cos_theta (bf16)
            pl.BlockSpec((tm, 1), lambda i, j, k: (i, 0)),    # target logit
        ],
        scratch_shapes=[pltpu.VMEM((tm, tn), jnp.float32),    # matmul accumulator
                        pltpu.VMEM((tm, 1), jnp.float32)],    # target-logit accumulator
        compiler_params=pltpu.CompilerParams(
            dimension_semantics=("parallel", "arbitrary", "arbitrary")),
    )(labels_p, xn, wt)

    # --- Glue: lower-median + index, adaptive scale, B_avg from the median row ---
    # TODO(synk): torch.median (sort-based lower median + index) has no Mosaic lowering;
    # it runs as XLA glue on the (B,) target-logit vector.
    tl_valid = tl[:B, 0]
    order = jnp.argsort(tl_valid)
    idx = order[(B - 1) // 2].astype(jnp.int32)               # lower median + its index
    med = tl_valid[idx]

    scale = LOG_CONST / (1.0 - med)
    scale = jnp.where(scale < 32.0, 32.0, scale).astype(f32)

    # method_B='default' in the reference is B_avg = B[index]: only the median
    # sample's row is needed -> one (1, Cp) slice + masked exp-sum.
    row = jax.lax.dynamic_slice(cos, (idx, 0), (1, Cp))[0].astype(f32)
    label_idx = targets_i[idx]
    col_ids = jnp.arange(Cp, dtype=jnp.int32)
    keep = (col_ids != label_idx) & (col_ids < C)             # exclude target + padded classes
    b_avg = jnp.sum(jnp.where(keep, jnp.exp(row * scale), 0.0))

    margin = med - jnp.log(b_avg * ALPHA / (1.0 - ALPHA)) / scale
    if TRAINING:
        margin = jnp.maximum(margin, 0.0)                     # margin.fill_(0) if negative
    else:
        margin = jnp.zeros_like(margin)
    shift = (scale * margin).astype(f32)
    scalars = jnp.stack([scale, shift]).astype(f32)           # (2,) -> SMEM

    # --- Kernel C: elementwise logits; big lane-dense tiles, decoupled from
    # the MXU tiling (pure HBM-roofline pass).  Output is f32 to match the
    # reference, so no input_output_aliases onto the bf16 cos buffer. ---
    tmc = _pick_tile(Bp, (256, 128, 64))
    tnc = 128
    for cand in (4096, 2048, 1024, 512, 256, 128):
        if Cp % cand == 0 and tmc * cand * (2 + 4) * 2 <= (12 << 20):
            tnc = cand
            break

    logit_p = pl.pallas_call(
        _logits_kernel,
        out_shape=jax.ShapeDtypeStruct((Bp, Cp), f32),
        grid=(Bp // tmc, Cp // tnc),
        in_specs=[
            pl.BlockSpec(memory_space=pltpu.MemorySpace.SMEM),     # [scale, scale*margin]
            pl.BlockSpec((tmc, 1), lambda i, j: (i, 0)),           # labels
            pl.BlockSpec((tmc, tnc), lambda i, j: (i, j)),         # cos_theta (bf16)
        ],
        out_specs=pl.BlockSpec((tmc, tnc), lambda i, j: (i, j)),
        compiler_params=pltpu.CompilerParams(
            dimension_semantics=("parallel", "parallel")),
    )(scalars, labels_p, cos)

    if (Bp, Cp) == (B, C):
        return logit_p
    return logit_p[:B, :C]


if __name__ == "__main__":
    B, D, C = 8, 32, 16   # batch, in_feat, num_classes

    key = jax.random.PRNGKey(0)
    k_x, k_w, k_t = jax.random.split(key, 3)

    features = jax.random.normal(k_x, (B, D), dtype=jnp.float32)
    targets = jax.random.randint(k_t, (B,), 0, C, dtype=jnp.int32)

    # reset_parameters(): uniform(-stdv, stdv), stdv = 1/sqrt(in_feat)
    stdv = 1.0 / math.sqrt(D)
    weight = jax.random.uniform(k_w, (C, D), minval=-stdv, maxval=stdv,
                                dtype=jnp.float32)

    out = madacos_forward(features, targets, weight)
    jax.block_until_ready(out)
    assert out.shape == (B, C) and out.dtype == jnp.float32
    print("KERNEL_OK")
</pallas_src>

<mosaic_0001>
module attributes {stable_mosaic.version = 11 : i64} {
  func.func @_l2norm_rows_kernel(%arg0: i32, %arg1: memref<64x128xf32, #tpu.memory_space<vmem>>, %arg2: memref<64x128xbf16, #tpu.memory_space<vmem>>) attributes {dimension_semantics = [#tpu.dimension_semantics<parallel>], iteration_bounds = array<i64: 2>, scalar_prefetch = 0 : i64, scratch_operands = 0 : i64, tpu.core_type = #tpu.core_type<tc>, window_params = [{transform_indices = @transform_0, window_bounds = array<i64: 64, 128>}, {transform_indices = @transform_1, window_bounds = array<i64: 64, 128>}]} {
    %c0 = arith.constant 0 : index
    %c0_0 = arith.constant 0 : index
    %0 = vector.load %arg1[%c0, %c0_0] : memref<64x128xf32, #tpu.memory_space<vmem>>, vector<64x128xf32>
    %1 = arith.mulf %0, %0 : vector<64x128xf32>
    %cst = arith.constant dense<0.000000e+00> : vector<64xf32>
    %2 = vector.multi_reduction <add>, %1, %cst [1] : vector<64x128xf32> to vector<64xf32>
    %3 = vector.shape_cast %2 : vector<64xf32> to vector<64x1xf32>
    %cst_1 = arith.constant 1.000000e-24 : f32
    %4 = vector.broadcast %cst_1 : f32 to vector<64x1xf32>
    %5 = arith.maximumf %3, %4 : vector<64x1xf32>
    %6 = math.rsqrt %5 : vector<64x1xf32>
    %7 = vector.broadcast %6 : vector<64x1xf32> to vector<64x128xf32>
    %8 = arith.mulf %0, %7 : vector<64x128xf32>
    %9 = arith.truncf %8 : vector<64x128xf32> to vector<64x128xbf16>
    %c0_2 = arith.constant 0 : index
    %c0_3 = arith.constant 0 : index
    %10 = vector.load %arg2[%c0_2, %c0_3] : memref<64x128xbf16, #tpu.memory_space<vmem>>, vector<64x128xbf16>
    tpu.vector_store %arg2[%c0_2, %c0_3], %9 {strides = array<i32>} : memref<64x128xbf16, #tpu.memory_space<vmem>>, vector<64x128xbf16>,
    return
  }
  func.func @transform_0(%arg0: i32) -> (i32, i32) {
    %c0_i32 = arith.constant 0 : i32
    %c0_i32_0 = arith.constant 0 : i32
    return %arg0, %c0_i32 : i32, i32
  }
  func.func @transform_1(%arg0: i32) -> (i32, i32) {
    %c0_i32 = arith.constant 0 : i32
    %c0_i32_0 = arith.constant 0 : i32
    return %arg0, %c0_i32 : i32, i32
  }
}

module attributes {stable_mosaic.version = 11 : i64} {
  func.func @_l2norm_rows_t_kernel(%arg0: i32, %arg1: memref<128x128xf32, #tpu.memory_space<vmem>>, %arg2: memref<128x128xbf16, #tpu.memory_space<vmem>>) attributes {dimension_semantics = [#tpu.dimension_semantics<parallel>], iteration_bounds = array<i64: 1>, scalar_prefetch = 0 : i64, scratch_operands = 0 : i64, tpu.core_type = #tpu.core_type<tc>, window_params = [{transform_indices = @transform_0, window_bounds = array<i64: 128, 128>}, {transform_indices = @transform_1, window_bounds = array<i64: 128, 128>}]} {
    %c0 = arith.constant 0 : index
    %c0_0 = arith.constant 0 : index
    %0 = vector.load %arg1[%c0, %c0_0] : memref<128x128xf32, #tpu.memory_space<vmem>>, vector<128x128xf32>
    %1 = arith.mulf %0, %0 : vector<128x128xf32>
    %cst = arith.constant dense<0.000000e+00> : vector<128xf32>
    %2 = vector.multi_reduction <add>, %1, %cst [1] : vector<128x128xf32> to vector<128xf32>
    %3 = vector.shape_cast %2 : vector<128xf32> to vector<128x1xf32>
    %cst_1 = arith.constant 1.000000e-24 : f32
    %4 = vector.broadcast %cst_1 : f32 to vector<128x1xf32>
    %5 = arith.maximumf %3, %4 : vector<128x1xf32>
    %6 = math.rsqrt %5 : vector<128x1xf32>
    %7 = vector.broadcast %6 : vector<128x1xf32> to vector<128x128xf32>
    %8 = arith.mulf %0, %7 : vector<128x128xf32>
    %9 = tpu.transpose %8, [1, 0] : vector<128x128xf32> -> vector<128x128xf32>
    %10 = arith.truncf %9 : vector<128x128xf32> to vector<128x128xbf16>
    %c0_2 = arith.constant 0 : index
    %c0_3 = arith.constant 0 : index
    %11 = vector.load %arg2[%c0_2, %c0_3] : memref<128x128xbf16, #tpu.memory_space<vmem>>, vector<128x128xbf16>
    tpu.vector_store %arg2[%c0_2, %c0_3], %10 {strides = array<i32>} : memref<128x128xbf16, #tpu.memory_space<vmem>>, vector<128x128xbf16>,
    return
  }
  func.func @transform_0(%arg0: i32) -> (i32, i32) {
    %c0_i32 = arith.constant 0 : i32
    %c0_i32_0 = arith.constant 0 : i32
    return %arg0, %c0_i32 : i32, i32
  }
  func.func @transform_1(%arg0: i32) -> (i32, i32) {
    %c0_i32 = arith.constant 0 : i32
    %c0_i32_0 = arith.constant 0 : i32
    return %c0_i32, %arg0 : i32, i32
  }
}

module attributes {stable_mosaic.version = 11 : i64} {
  func.func @_cos_tl_kernel(%arg0: i32, %arg1: i32, %arg2: i32, %arg3: memref<64x1xi32, #tpu.memory_space<vmem>>, %arg4: memref<64x128xbf16, #tpu.memory_space<vmem>>, %arg5: memref<128x128xbf16, #tpu.memory_space<vmem>>, %arg6: memref<64x128xbf16, #tpu.memory_space<vmem>>, %arg7: memref<64x1xf32, #tpu.memory_space<vmem>>, %arg8: memref<64x128xf32, #tpu.memory_space<vmem>>, %arg9: memref<64x1xf32, #tpu.memory_space<vmem>>) attributes {dimension_semantics = [#tpu.dimension_semantics<parallel>, #tpu.dimension_semantics<arbitrary>, #tpu.dimension_semantics<arbitrary>], iteration_bounds = array<i64: 2, 1, 1>, scalar_prefetch = 0 : i64, scratch_operands = 2 : i64, tpu.core_type = #tpu.core_type<tc>, window_params = [{transform_indices = @transform_0, window_bounds = array<i64: 64, 1>}, {transform_indices = @transform_1, window_bounds = array<i64: 64, 128>}, {transform_indices = @transform_2, window_bounds = array<i64: 128, 128>}, {transform_indices = @transform_3, window_bounds = array<i64: 64, 128>}, {transform_indices = @transform_4, window_bounds = array<i64: 64, 1>}]} {
    %c0_i32 = arith.constant 0 : i32
    %0 = arith.cmpi eq, %arg2, %c0_i32 : i32
    %1 = arith.extui %0 : i1 to i32
    %c0_i32_0 = arith.constant 0 : i32
    %2 = arith.cmpi ne, %1, %c0_i32_0 : i32
    scf.if %2 {
      %cst_10 = arith.constant 0.000000e+00 : f32
      %12 = vector.broadcast %cst_10 : f32 to vector<64x128xf32>
      %c0_11 = arith.constant 0 : index
      %c0_12 = arith.constant 0 : index
      %13 = vector.load %arg8[%c0_11, %c0_12] : memref<64x128xf32, #tpu.memory_space<vmem>>, vector<64x128xf32>
      tpu.vector_store %arg8[%c0_11, %c0_12], %12 {strides = array<i32>} : memref<64x128xf32, #tpu.memory_space<vmem>>, vector<64x128xf32>,
    } else {
    }
    %c0 = arith.constant 0 : index
    %c0_1 = arith.constant 0 : index
    %3 = vector.load %arg8[%c0, %c0_1] : memref<64x128xf32, #tpu.memory_space<vmem>>, vector<64x128xf32>
    %c0_2 = arith.constant 0 : index
    %c0_3 = arith.constant 0 : index
    %4 = vector.load %arg4[%c0_2, %c0_3] : memref<64x128xbf16, #tpu.memory_space<vmem>>, vector<64x128xbf16>
    %c0_4 = arith.constant 0 : index
    %c0_5 = arith.constant 0 : index
    %5 = vector.load %arg5[%c0_4, %c0_5] : memref<128x128xbf16, #tpu.memory_space<vmem>>, vector<128x128xbf16>
    %cst = arith.constant dense<0.000000e+00> : vector<64x128xf32>
    %6 = tpu.matmul %4, %5, %cst {dimension_numbers = #tpu.dot_dimension_numbers<[1], [0], [0], [1], [0, 0, 1, 1], [], []>} : vector<64x128xbf16>, vector<128x128xbf16>, vector<64x128xf32> -> vector<64x128xf32>
    %7 = arith.addf %3, %6 : vector<64x128xf32>
    %c0_6 = arith.constant 0 : index
    %c0_7 = arith.constant 0 : index
    %8 = vector.load %arg8[%c0_6, %c0_7] : memref<64x128xf32, #tpu.memory_space<vmem>>, vector<64x128xf32>
    tpu.vector_store %arg8[%c0_6, %c0_7], %7 {strides = array<i32>} : memref<64x128xf32, #tpu.memory_space<vmem>>, vector<64x128xf32>,
    %c0_i32_8 = arith.constant 0 : i32
    %9 = arith.cmpi eq, %arg2, %c0_i32_8 : i32
    %10 = arith.extui %9 : i1 to i32
    %c0_i32_9 = arith.constant 0 : i32
    %11 = arith.cmpi ne, %10, %c0_i32_9 : i32
    scf.if %11 {
      %c0_10 = arith.constant 0 : index
      %c0_11 = arith.constant 0 : index
      %12 = vector.load %arg8[%c0_10, %c0_11] : memref<64x128xf32, #tpu.memory_space<vmem>>, vector<64x128xf32>
      %13 = arith.truncf %12 : vector<64x128xf32> to vector<64x128xbf16>
      %c0_12 = arith.constant 0 : index
      %c0_13 = arith.constant 0 : index
      %14 = vector.load %arg6[%c0_12, %c0_13] : memref<64x128xbf16, #tpu.memory_space<vmem>>, vector<64x128xbf16>
      tpu.vector_store %arg6[%c0_12, %c0_13], %13 {strides = array<i32>} : memref<64x128xbf16, #tpu.memory_space<vmem>>, vector<64x128xbf16>,
      %15 = tpu.iota {dimensions = array<i32: 1>} : vector<64x128xi32>
      %c128_i32 = arith.constant 128 : i32
      %16 = arith.muli %arg1, %c128_i32 : i32
      %17 = vector.broadcast %16 : i32 to vector<64x128xi32>
      %18 = arith.addi %15, %17 : vector<64x128xi32>
      %c0_14 = arith.constant 0 : index
      %c0_15 = arith.constant 0 : index
      %19 = vector.load %arg3[%c0_14, %c0_15] : memref<64x1xi32, #tpu.memory_space<vmem>>, vector<64x1xi32>
      %20 = vector.broadcast %19 : vector<64x1xi32> to vector<64x128xi32>
      %21 = arith.cmpi eq, %18, %20 : vector<64x128xi32>
      %c0_i32_16 = arith.constant 0 : i32
      %22 = arith.cmpi eq, %arg1, %c0_i32_16 : i32
      %23 = arith.extui %22 : i1 to i32
      %c0_i32_17 = arith.constant 0 : i32
      %24 = arith.cmpi ne, %23, %c0_i32_17 : i32
      scf.if %24 {
        %cst_26 = arith.constant 0.000000e+00 : f32
        %35 = vector.broadcast %cst_26 : f32 to vector<64x1xf32>
        %c0_27 = arith.constant 0 : index
        %c0_28 = arith.constant 0 : index
        %36 = vector.load %arg9[%c0_27, %c0_28] : memref<64x1xf32, #tpu.memory_space<vmem>>, vector<64x1xf32>
        tpu.vector_store %arg9[%c0_27, %c0_28], %35 {strides = array<i32>} : memref<64x1xf32, #tpu.memory_space<vmem>>, vector<64x1xf32>,
      } else {
      }
      %c0_18 = arith.constant 0 : index
      %c0_19 = arith.constant 0 : index
      %25 = vector.load %arg9[%c0_18, %c0_19] : memref<64x1xf32, #tpu.memory_space<vmem>>, vector<64x1xf32>
      %cst_20 = arith.constant 0.000000e+00 : f32
      %26 = vector.broadcast %cst_20 : f32 to vector<64x128xf32>
      %27 = arith.select %21, %12, %26 : vector<64x128xi1>, vector<64x128xf32>
      %cst_21 = arith.constant dense<0.000000e+00> : vector<64xf32>
      %28 = vector.multi_reduction <add>, %27, %cst_21 [1] : vector<64x128xf32> to vector<64xf32>
      %29 = vector.shape_cast %28 : vector<64xf32> to vector<64x1xf32>
      %30 = arith.addf %25, %29 : vector<64x1xf32>
      %c0_22 = arith.constant 0 : index
      %c0_23 = arith.constant 0 : index
      %31 = vector.load %arg9[%c0_22, %c0_23] : memref<64x1xf32, #tpu.memory_space<vmem>>, vector<64x1xf32>
      tpu.vector_store %arg9[%c0_22, %c0_23], %30 {strides = array<i32>} : memref<64x1xf32, #tpu.memory_space<vmem>>, vector<64x1xf32>,
      %c0_i32_24 = arith.constant 0 : i32
      %32 = arith.cmpi eq, %arg1, %c0_i32_24 : i32
      %33 = arith.extui %32 : i1 to i32
      %c0_i32_25 = arith.constant 0 : i32
      %34 = arith.cmpi ne, %33, %c0_i32_25 : i32
      scf.if %34 {
        %c0_26 = arith.constant 0 : index
        %c0_27 = arith.constant 0 : index
        %35 = vector.load %arg9[%c0_26, %c0_27] : memref<64x1xf32, #tpu.memory_space<vmem>>, vector<64x1xf32>
        %c0_28 = arith.constant 0 : index
        %c0_29 = arith.constant 0 : index
        %36 = vector.load %arg7[%c0_28, %c0_29] : memref<64x1xf32, #tpu.memory_space<vmem>>, vector<64x1xf32>
        tpu.vector_store %arg7[%c0_28, %c0_29], %35 {strides = array<i32>} : memref<64x1xf32, #tpu.memory_space<vmem>>, vector<64x1xf32>,
      } else {
      }
    } else {
    }
    return
  }
  func.func @transform_0(%arg0: i32, %arg1: i32, %arg2: i32) -> (i32, i32) {
    %c0_i32 = arith.constant 0 : i32
    %c0_i32_0 = arith.constant 0 : i32
    return %arg0, %c0_i32 : i32, i32
  }
  func.func @transform_1(%arg0: i32, %arg1: i32, %arg2: i32) -> (i32, i32) {
    %c0_i32 = arith.constant 0 : i32
    return %arg0, %arg2 : i32, i32
  }
  func.func @transform_2(%arg0: i32, %arg1: i32, %arg2: i32) -> (i32, i32) {
    %c0_i32 = arith.constant 0 : i32
    return %arg2, %arg1 : i32, i32
  }
  func.func @transform_3(%arg0: i32, %arg1: i32, %arg2: i32) -> (i32, i32) {
    %c0_i32 = arith.constant 0 : i32
    return %arg0, %arg1 : i32, i32
  }
  func.func @transform_4(%arg0: i32, %arg1: i32, %arg2: i32) -> (i32, i32) {
    %c0_i32 = arith.constant 0 : i32
    %c0_i32_0 = arith.constant 0 : i32
    return %arg0, %c0_i32 : i32, i32
  }
}

module attributes {stable_mosaic.version = 11 : i64} {
  func.func @_logits_kernel(%arg0: i32, %arg1: i32, %arg2: memref<2xf32, #tpu.memory_space<smem>>, %arg3: memref<128x1xi32, #tpu.memory_space<vmem>>, %arg4: memref<128x128xbf16, #tpu.memory_space<vmem>>, %arg5: memref<128x128xf32, #tpu.memory_space<vmem>>) attributes {dimension_semantics = [#tpu.dimension_semantics<parallel>, #tpu.dimension_semantics<parallel>], iteration_bounds = array<i64: 1, 1>, scalar_prefetch = 0 : i64, scratch_operands = 0 : i64, tpu.core_type = #tpu.core_type<tc>, window_params = [{transform_indices = @transform_0, window_bounds = array<i64: 2>}, {transform_indices = @transform_1, window_bounds = array<i64: 128, 1>}, {transform_indices = @transform_2, window_bounds = array<i64: 128, 128>}, {transform_indices = @transform_3, window_bounds = array<i64: 128, 128>}]} {
    %c0 = arith.constant 0 : index
    %0 = memref.load %arg2[%c0] : memref<2xf32, #tpu.memory_space<smem>>
    %c1 = arith.constant 1 : index
    %1 = memref.load %arg2[%c1] : memref<2xf32, #tpu.memory_space<smem>>
    %c0_0 = arith.constant 0 : index
    %c0_1 = arith.constant 0 : index
    %2 = vector.load %arg4[%c0_0, %c0_1] : memref<128x128xbf16, #tpu.memory_space<vmem>>, vector<128x128xbf16>
    %3 = arith.extf %2 : vector<128x128xbf16> to vector<128x128xf32>
    %4 = tpu.iota {dimensions = array<i32: 1>} : vector<128x128xi32>
    %c128_i32 = arith.constant 128 : i32
    %5 = arith.muli %arg1, %c128_i32 : i32
    %6 = vector.broadcast %5 : i32 to vector<128x128xi32>
    %7 = arith.addi %4, %6 : vector<128x128xi32>
    %c0_2 = arith.constant 0 : index
    %c0_3 = arith.constant 0 : index
    %8 = vector.load %arg3[%c0_2, %c0_3] : memref<128x1xi32, #tpu.memory_space<vmem>>, vector<128x1xi32>
    %9 = vector.broadcast %8 : vector<128x1xi32> to vector<128x128xi32>
    %10 = arith.cmpi eq, %7, %9 : vector<128x128xi32>
    %11 = vector.broadcast %0 : f32 to vector<128x128xf32>
    %12 = arith.mulf %3, %11 : vector<128x128xf32>
    %13 = vector.broadcast %1 : f32 to vector<128x128xf32>
    %14 = arith.subf %12, %13 : vector<128x128xf32>
    %15 = arith.select %10, %14, %12 : vector<128x128xi1>, vector<128x128xf32>
    %c0_4 = arith.constant 0 : index
    %c0_5 = arith.constant 0 : index
    %16 = vector.load %arg5[%c0_4, %c0_5] : memref<128x128xf32, #tpu.memory_space<vmem>>, vector<128x128xf32>
    tpu.vector_store %arg5[%c0_4, %c0_5], %15 {strides = array<i32>} : memref<128x128xf32, #tpu.memory_space<vmem>>, vector<128x128xf32>,
    return
  }
  func.func @transform_0(%arg0: i32, %arg1: i32) -> i32 {
    %c0_i32 = arith.constant 0 : i32
    %c0_i32_0 = arith.constant 0 : i32
    return %c0_i32 : i32
  }
  func.func @transform_1(%arg0: i32, %arg1: i32) -> (i32, i32) {
    %c0_i32 = arith.constant 0 : i32
    %c0_i32_0 = arith.constant 0 : i32
    return %arg0, %c0_i32 : i32, i32
  }
  func.func @transform_2(%arg0: i32, %arg1: i32) -> (i32, i32) {
    %c0_i32 = arith.constant 0 : i32
    return %arg0, %arg1 : i32, i32
  }
  func.func @transform_3(%arg0: i32, %arg1: i32) -> (i32, i32) {
    %c0_i32 = arith.constant 0 : i32
    return %arg0, %arg1 : i32, i32
  }
}

</mosaic_0001>

<llo_original>
// kernel: madacos_forward.5
$region0: #{madacos_forward.5}
  #allocation0 [shape = 'u32[]', space=smem, size = 0x4, offset = 0x4, fixed_abs, tag = 'smem constant byte address 0x4 - core index']
  #allocation1 [shape = 'u32[144,128]{1,0:T(1,128)}', space=vmem, size = 0x12000, scoped, tag = 'internal scratch']
  %s0 = inlined_call_operand.vmem [shape: f32[128,128], index: 0, kind: input, shape index: {}]
  %s1 = inlined_call_operand.vmem [shape: bf16[128,128], index: 1, kind: output, shape index: {}]
  %s2 = sld [smem:[#allocation0]]
  $region14: #{madacos_forward.5} parent=0
    _
  %s4 = ssub.s32 1, %s2
  %s5 = scalar_select 0, %s4, %s2
  // Predicated region
  $region2: #{madacos_forward.5} parent=0 // pred_check
    _
  $region3: #{madacos_forward.5} parent=0 // pred_check_branch
    %7 = sbr.rel (0) target = $region5
  $region4: #{madacos_forward.5} parent=0 // pred_region
    _
  $region5: #{madacos_forward.5} parent=0 // pred_fallthru
    _
  %v8 = vld [vmem:[%s0] sm:$0xff]
  %v9 = vld [vmem:[%s0 + $0x8] sm:$0xff]
  %v10 = vld [vmem:[%s0 + $0x10] sm:$0xff]
  %v11 = vld [vmem:[%s0 + $0x18] sm:$0xff]
  %v12 = vld [vmem:[%s0 + $0x20] sm:$0xff]
  %v13 = vld [vmem:[%s0 + $0x28] sm:$0xff]
  %v14 = vld [vmem:[%s0 + $0x30] sm:$0xff]
  %v15 = vld [vmem:[%s0 + $0x38] sm:$0xff]
  %v16 = vld [vmem:[%s0 + $0x40] sm:$0xff]
  %v17 = vld [vmem:[%s0 + $0x48] sm:$0xff]
  %v18 = vld [vmem:[%s0 + $0x50] sm:$0xff]
  %v19 = vld [vmem:[%s0 + $0x58] sm:$0xff]
  %v20 = vld [vmem:[%s0 + $0x60] sm:$0xff]
  %v21 = vld [vmem:[%s0 + $0x68] sm:$0xff]
  %v22 = vld [vmem:[%s0 + $0x70] sm:$0xff]
  %v23 = vld [vmem:[%s0 + $0x78] sm:$0xff]
  %v24 = vmul.f32 %v8, %v8
  %v25 = vmul.f32 %v9, %v9
  %v26 = vmul.f32 %v10, %v10
  %v27 = vmul.f32 %v11, %v11
  %v28 = vmul.f32 %v12, %v12
  %v29 = vmul.f32 %v13, %v13
  %v30 = vmul.f32 %v14, %v14
  %v31 = vmul.f32 %v15, %v15
  %v32 = vmul.f32 %v16, %v16
  %v33 = vmul.f32 %v17, %v17
  %v34 = vmul.f32 %v18, %v18
  %v35 = vmul.f32 %v19, %v19
  %v36 = vmul.f32 %v20, %v20
  %v37 = vmul.f32 %v21, %v21
  %v38 = vmul.f32 %v22, %v22
  %v39 = vmul.f32 %v23, %v23
  %40 = vadd.xlane.f32.xlu0 %v24
  %v41 = vpop.xlane.xlu0 %40
  %42 = vadd.xlane.f32.xlu0 %v25
  %v43 = vpop.xlane.xlu0 %42
  %44 = vadd.xlane.f32.xlu0 %v26
  %v45 = vpop.xlane.xlu0 %44
  %46 = vadd.xlane.f32.xlu0 %v27
  %v47 = vpop.xlane.xlu0 %46
  %48 = vadd.xlane.f32.xlu0 %v28
  %v49 = vpop.xlane.xlu0 %48
  %50 = vadd.xlane.f32.xlu0 %v29
  %v51 = vpop.xlane.xlu0 %50
  %52 = vadd.xlane.f32.xlu0 %v30
  %v53 = vpop.xlane.xlu0 %52
  %54 = vadd.xlane.f32.xlu0 %v31
  %v55 = vpop.xlane.xlu0 %54
  %56 = vadd.xlane.f32.xlu0 %v32
  %v57 = vpop.xlane.xlu0 %56
  %58 = vadd.xlane.f32.xlu0 %v33
  %v59 = vpop.xlane.xlu0 %58
  %60 = vadd.xlane.f32.xlu0 %v34
  %v61 = vpop.xlane.xlu0 %60
  %62 = vadd.xlane.f32.xlu0 %v35
  %v63 = vpop.xlane.xlu0 %62
  %64 = vadd.xlane.f32.xlu0 %v36
  %v65 = vpop.xlane.xlu0 %64
  %66 = vadd.xlane.f32.xlu0 %v37
  %v67 = vpop.xlane.xlu0 %66
  %68 = vadd.xlane.f32.xlu0 %v38
  %v69 = vpop.xlane.xlu0 %68
  %70 = vadd.xlane.f32.xlu0 %v39
  %v71 = vpop.xlane.xlu0 %70
  %v72 = vmax.f32 %v41, 1e-24
  %v73 = vmax.f32 %v43, 1e-24
  %v74 = vmax.f32 %v45, 1e-24
  %v75 = vmax.f32 %v47, 1e-24
  %v76 = vmax.f32 %v49, 1e-24
  %v77 = vmax.f32 %v51, 1e-24
  %v78 = vmax.f32 %v53, 1e-24
  %v79 = vmax.f32 %v55, 1e-24
  %v80 = vmax.f32 %v57, 1e-24
  %v81 = vmax.f32 %v59, 1e-24
  %v82 = vmax.f32 %v61, 1e-24
  %v83 = vmax.f32 %v63, 1e-24
  %v84 = vmax.f32 %v65, 1e-24
  %v85 = vmax.f32 %v67, 1e-24
  %v86 = vmax.f32 %v69, 1e-24
  %v87 = vmax.f32 %v71, 1e-24
  %v88 = vrsqrt.pop %v72
  %v89 = vrsqrt.pop %v73
  %v90 = vrsqrt.pop %v74
  %v91 = vrsqrt.pop %v75
  %v92 = vrsqrt.pop %v76
  %v93 = vrsqrt.pop %v77
  %v94 = vrsqrt.pop %v78
  %v95 = vrsqrt.pop %v79
  %v96 = vrsqrt.pop %v80
  %v97 = vrsqrt.pop %v81
  %v98 = vrsqrt.pop %v82
  %v99 = vrsqrt.pop %v83
  %v100 = vrsqrt.pop %v84
  %v101 = vrsqrt.pop %v85
  %v102 = vrsqrt.pop %v86
  %v103 = vrsqrt.pop %v87
  %v104 = vmul.f32 %v8, %v88
  %v105 = vmul.f32 %v9, %v89
  %v106 = vmul.f32 %v10, %v90
  %v107 = vmul.f32 %v11, %v91
  %v108 = vmul.f32 %v12, %v92
  %v109 = vmul.f32 %v13, %v93
  %v110 = vmul.f32 %v14, %v94
  %v111 = vmul.f32 %v15, %v95
  %v112 = vmul.f32 %v16, %v96
  %v113 = vmul.f32 %v17, %v97
  %v114 = vmul.f32 %v18, %v98
  %v115 = vmul.f32 %v19, %v99
  %v116 = vmul.f32 %v20, %v100
  %v117 = vmul.f32 %v21, %v101
  %v118 = vmul.f32 %v22, %v102
  %v119 = vmul.f32 %v23, %v103
  %120 = vxpose.xlu0.b32.start [1/16] %v104, 128
  %121 = vxpose.xlu0.b32.cont [2/16] %v105, 128
  %122 = vxpose.xlu0.b32.cont [3/16] %v106, 128
  %123 = vxpose.xlu0.b32.cont [4/16] %v107, 128
  %124 = vxpose.xlu0.b32.cont [5/16] %v108, 128
  %125 = vxpose.xlu0.b32.cont [6/16] %v109, 128
  %126 = vxpose.xlu0.b32.cont [7/16] %v110, 128
  %127 = vxpose.xlu0.b32.cont [8/16] %v111, 128
  %128 = vxpose.xlu0.b32.cont [9/16] %v112, 128
  %129 = vxpose.xlu0.b32.cont [10/16] %v113, 128
  %130 = vxpose.xlu0.b32.cont [11/16] %v114, 128
  %131 = vxpose.xlu0.b32.cont [12/16] %v115, 128
  %132 = vxpose.xlu0.b32.cont [13/16] %v116, 128
  %133 = vxpose.xlu0.b32.cont [14/16] %v117, 128
  %134 = vxpose.xlu0.b32.cont [15/16] %v118, 128
  %135 = vxpose.xlu0.b32.end [16/16] %v119, 128
  %v136 = vpop.trf.xlu0
  %v137 = vpop.trf.xlu0
  %v138 = vpop.trf.xlu0
  %v139 = vpop.trf.xlu0
  %v140 = vpop.trf.xlu0
  %v141 = vpop.trf.xlu0
  %v142 = vpop.trf.xlu0
  %v143 = vpop.trf.xlu0
  %v144 = vpop.trf.xlu0
  %v145 = vpop.trf.xlu0
  %v146 = vpop.trf.xlu0
  %v147 = vpop.trf.xlu0
  %v148 = vpop.trf.xlu0
  %v149 = vpop.trf.xlu0
  %v150 = vpop.trf.xlu0
  %v151 = vpop.trf.xlu0
  %v152 = vpack.c.bf16 %v137, %v136
  %v153 = vpack.c.bf16 %v139, %v138
  %v154 = vpack.c.bf16 %v141, %v140
  %v155 = vpack.c.bf16 %v143, %v142
  %v156 = vpack.c.bf16 %v145, %v144
  %v157 = vpack.c.bf16 %v147, %v146
  %v158 = vpack.c.bf16 %v149, %v148
  %v159 = vpack.c.bf16 %v151, %v150
  %v168 = vunpack.c.l.b16 %v152
  %v169 = vunpack.c.h.b16 %v152
  %v170 = vunpack.c.l.b16 %v153
  %v171 = vunpack.c.h.b16 %v153
  %v172 = vunpack.c.l.b16 %v154
  %v173 = vunpack.c.h.b16 %v154
  %v174 = vunpack.c.l.b16 %v155
  %v175 = vunpack.c.h.b16 %v155
  %v176 = vunpack.c.l.b16 %v156
  %v177 = vunpack.c.h.b16 %v156
  %v178 = vunpack.c.l.b16 %v157
  %v179 = vunpack.c.h.b16 %v157
  %v180 = vunpack.c.l.b16 %v158
  %v181 = vunpack.c.h.b16 %v158
  %v182 = vunpack.c.l.b16 %v159
  %v183 = vunpack.c.h.b16 %v159
  %v184 = vpack.c.b16 %v168, %v168
  %v185 = vpack.c.b16 %v169, %v169
  %v186 = vpack.c.b16 %v170, %v170
  %v187 = vpack.c.b16 %v171, %v171
  %v188 = vpack.c.b16 %v172, %v172
  %v189 = vpack.c.b16 %v173, %v173
  %v190 = vpack.c.b16 %v174, %v174
  %v191 = vpack.c.b16 %v175, %v175
  %v192 = vpack.c.b16 %v176, %v176
  %v193 = vpack.c.b16 %v177, %v177
  %v194 = vpack.c.b16 %v178, %v178
  %v195 = vpack.c.b16 %v179, %v179
  %v196 = vpack.c.b16 %v180, %v180
  %v197 = vpack.c.b16 %v181, %v181
  %v198 = vpack.c.b16 %v182, %v182
  %v199 = vpack.c.b16 %v183, %v183
  %216 = vst [vmem:[%s1] sm:$0xf] %v184
  %217 = vst [vmem:[%s1 + $0x4] sm:$0xf] %v185
  %218 = vst [vmem:[%s1 + $0x8] sm:$0xf] %v186
  %219 = vst [vmem:[%s1 + $0xc] sm:$0xf] %v187
  %220 = vst [vmem:[%s1 + $0x10] sm:$0xf] %v188
  %221 = vst [vmem:[%s1 + $0x14] sm:$0xf] %v189
  %222 = vst [vmem:[%s1 + $0x18] sm:$0xf] %v190
  %223 = vst [vmem:[%s1 + $0x1c] sm:$0xf] %v191
  %224 = vst [vmem:[%s1 + $0x20] sm:$0xf] %v192
  %225 = vst [vmem:[%s1 + $0x24] sm:$0xf] %v193
  %226 = vst [vmem:[%s1 + $0x28] sm:$0xf] %v194
  %227 = vst [vmem:[%s1 + $0x2c] sm:$0xf] %v195
  %228 = vst [vmem:[%s1 + $0x30] sm:$0xf] %v196
  %229 = vst [vmem:[%s1 + $0x34] sm:$0xf] %v197
  %230 = vst [vmem:[%s1 + $0x38] sm:$0xf] %v198
  %231 = vst [vmem:[%s1 + $0x3c] sm:$0xf] %v199
  // Predicated region
  $region6: #{madacos_forward.5} parent=0 // pred_check
    _
  $region7: #{madacos_forward.5} parent=0 // pred_check_branch
    %233 = sbr.rel (0) target = $region9
  $region8: #{madacos_forward.5} parent=0 // pred_region
    _
  $region9: #{madacos_forward.5} parent=0 // pred_fallthru
    _
  // Predicated region
  $region10: #{madacos_forward.5} parent=0 // pred_check
    _
  $region11: #{madacos_forward.5} parent=0 // pred_check_branch
    %235 = sbr.rel (0) target = $region13
  $region12: #{madacos_forward.5} parent=0 // pred_region
    _
  $region13: #{madacos_forward.5} parent=0 // pred_fallthru
    _

// kernel: madacos_forward.4
$region0: #{madacos_forward.4}
  #allocation0 [shape = 'u32[]', space=smem, size = 0x4, offset = 0x4, fixed_abs, tag = 'smem constant byte address 0x4 - core index']
  #allocation1 [shape = 'u32[144,128]{1,0:T(1,128)}', space=vmem, size = 0x12000, scoped, tag = 'internal scratch']
  %s0 = inlined_call_operand.vmem [shape: f32[128,128], index: 0, kind: input, shape index: {}]
  %s1 = inlined_call_operand.vmem [shape: bf16[128,128], index: 1, kind: output, shape index: {}]
  %s2 = sld [smem:[#allocation0]]
  $region37: #{madacos_forward.4} parent=0
    _
  %s4 = ssub.s32 1, %s2
  %s5 = scalar_select 0, %s4, %s2
  loop: start=0, step=1, limit=4
  $region2: #{madacos_forward.4} parent=0 // loop_pre_header
    _
  $region3: #{madacos_forward.4} parent=0 // loop_header
    %s7 = sphi 0, %s11
    %p8 = scmp.ge.s32.totalorder %s7, 4
    %s17 = sphi 0, %s19
    %s20 = sphi 0, %s17
    %s21 = sphi 0, %s20
    %s37 = sphi 0, %s21
    %s43 = sphi 0, %s45
    %s46 = sphi 0, %s43
    %s47 = sphi 0, %s46
    %s63 = sphi 0, %s47
  $region4: #{madacos_forward.4} parent=0 // loop_header_branch
    %10 = sbr.rel (%p8) target = $region8
  $region5: #{madacos_forward.4} parent=0 // loop_body
    %s12 = ssub.s32 %s7, 1
    %s13 = ssub.s32 %s7, 2
    %s14 = sadd.s32 %s7, 1
    %s15 = ssub.s32 %s7, %s14
    %p16 = scmp.eq.s32.totalorder %s15, 0
    %s18 = sadd.s32 %s17, 1
    %s19 = scalar_select %p16, %s17, %s18
    %p22 = pneg %p16
    %p23 = scmp.eq.s32.totalorder %s7, 1
    %p24 = por %p22, %p23
    %p25 = scmp.ne.s32.totalorder %s17, %s20
    %p26 = scmp.eq.s32.totalorder %s7, 0
    %p27 = por %p25, %p26
    %p28 = scmp.ne.s32.totalorder %s17, %s20
    %p29 = scmp.eq.s32.totalorder %s12, 1
    %p30 = por %p28, %p29
    %p31 = scmp.ne.s32.totalorder %s20, %s21
    %p32 = scmp.eq.s32.totalorder %s12, 0
    %p33 = por %p31, %p32
    %p34 = scmp.ne.s32.totalorder %s20, %s21
    %p35 = scmp.eq.s32.totalorder %s13, 1
    %p36 = por %p34, %p35
    %p38 = scmp.ne.s32.totalorder %s21, %s37
    %p39 = scmp.eq.s32.totalorder %s13, 0
    %p40 = por %p38, %p39
    %s41 = ssub.s32 %s7, %s14
    %p42 = scmp.eq.s32.totalorder %s41, 0
    %s44 = sadd.s32 %s43, 1
    %s45 = scalar_select %p42, %s43, %s44
    %p48 = pneg %p42
    %p49 = scmp.eq.s32.totalorder %s7, 1
    %p50 = por %p48, %p49
    %p51 = scmp.ne.s32.totalorder %s43, %s46
    %p52 = scmp.eq.s32.totalorder %s7, 0
    %p53 = por %p51, %p52
    %p54 = scmp.ne.s32.totalorder %s43, %s46
    %p55 = scmp.eq.s32.totalorder %s12, 1
    %p56 = por %p54, %p55
    %p57 = scmp.ne.s32.totalorder %s46, %s47
    %p58 = scmp.eq.s32.totalorder %s12, 0
    %p59 = por %p57, %p58
    %p60 = scmp.ne.s32.totalorder %s46, %s47
    %p61 = scmp.eq.s32.totalorder %s13, 1
    %p62 = por %p60, %p61
    %p64 = scmp.ne.s32.totalorder %s47, %s63
    %p65 = scmp.eq.s32.totalorder %s13, 0
    %p66 = por %p64, %p65
    %p67 = scmp.le.s32.totalorder 1, %s7
    %p68 = scmp.lt.s32.totalorder %s7, 3
    %p69 = pnand %p67, %p68
    %p70 = pneg %p69
    // Predicated region
    $region9: #{madacos_forward.4} parent=5 // pred_check
      _
    $region10: #{madacos_forward.4} parent=5 // pred_check_branch
      %72 = sbr.rel (%p69) target = $region12
    $region11: #{madacos_forward.4} parent=5 // pred_region
      %s73 = ssub.s32 %s7, 1
    $region12: #{madacos_forward.4} parent=5 // pred_fallthru
      _
    %p74 = scmp.lt.s32.totalorder %s7, 2
    // Predicated region
    $region13: #{madacos_forward.4} parent=5 // pred_check
      %p75 = pneg %p74
    $region14: #{madacos_forward.4} parent=5 // pred_check_branch
      %77 = sbr.rel (%p75) target = $region16
    $region15: #{madacos_forward.4} parent=5 // pred_region
      // Predicated region
      $region17: #{madacos_forward.4} parent=15 // pred_check
        %p78 = pneg %p27
      $region18: #{madacos_forward.4} parent=15 // pred_check_branch
        %80 = sbr.rel (%p78) target = $region20
      $region19: #{madacos_forward.4} parent=15 // pred_region
        %s81 = smul.u32 8, %s7
        %p82 = scmp.lt.s32.totalorder %s81, 15
        %s83 = scalar_select %p82, %s81, 15
        %s84 = smul.addr %s83, 8
        %s85 = scalar_lea.vmem %s0, %s84
        %s86 = smul.u32 8, %s7
      $region20: #{madacos_forward.4} parent=15 // pred_fallthru
        _
    $region16: #{madacos_forward.4} parent=5 // pred_fallthru
      _
    %p87 = scmp.le.s32.totalorder 1, %s7
    %p88 = scmp.lt.s32.totalorder %s7, 3
    %p89 = pnand %p87, %p88
    %p90 = pneg %p89
    // Predicated region
    $region21: #{madacos_forward.4} parent=5 // pred_check
      _
    $region22: #{madacos_forward.4} parent=5 // pred_check_branch
      %92 = sbr.rel (%p89) target = $region24
    $region23: #{madacos_forward.4} parent=5 // pred_region
      %s93 = ssub.s32 %s7, 1
      %s94 = smul.u32 8, %s12
      %p95 = scmp.lt.s32.totalorder %s94, 15
      %s96 = scalar_select %p95, %s94, 15
      %s97 = smul.addr %s96, 8
      %s98 = scalar_lea.vmem %s0, %s97
      %p99 = pneg %p33
      %p100 = pneg %p30
      %p101 = pneg %p59
      %p102 = pneg %p56
      %s103 = smul.u32 8, %s12
      %p104 = scmp.lt.s32.totalorder %s103, 15
      %s105 = scalar_select %p104, %s103, 15
      %s106 = smul.addr %s105, 4
      %s107 = scalar_lea.vmem %s1, %s106
      %s108 = smul.u32 8, %s12
      %p109 = scmp.lt.s32.totalorder %s108, 15
      %s110 = scalar_select %p109, %s108, 15
      %s111 = smul.addr %s110, 8
      %s112 = scalar_lea.vmem %s0, %s111
      %s113 = smul.u32 8, %s12
      %s114 = smul.u32 8, %s12
      %p115 = scmp.lt.s32.totalorder %s114, 15
      %s116 = scalar_select %p115, %s114, 15
      %s117 = smul.addr %s116, 4
      %s118 = scalar_lea.vmem %s1, %s117
      %s119 = smul.u32 8, %s12
      %v120 = vld [vmem:[%s112] sm:$0xff]
      %v121 = vld [vmem:[%s112 + $0x8] sm:$0xff]
      %v122 = vld [vmem:[%s112 + $0x10] sm:$0xff]
      %v123 = vld [vmem:[%s112 + $0x18] sm:$0xff]
      %v124 = vld [vmem:[%s112 + $0x20] sm:$0xff]
      %v125 = vld [vmem:[%s112 + $0x28] sm:$0xff]
      %v126 = vld [vmem:[%s112 + $0x30] sm:$0xff]
      %v127 = vld [vmem:[%s112 + $0x38] sm:$0xff]
      %v128 = vmul.f32 %v120, %v120
      %v129 = vmul.f32 %v121, %v121
      %v130 = vmul.f32 %v122, %v122
      %v131 = vmul.f32 %v123, %v123
      %v132 = vmul.f32 %v124, %v124
      %v133 = vmul.f32 %v125, %v125
      %v134 = vmul.f32 %v126, %v126
      %v135 = vmul.f32 %v127, %v127
      %136 = vadd.xlane.f32.xlu0 %v128
      %v137 = vpop.xlane.xlu0 %136
      %138 = vadd.xlane.f32.xlu0 %v129
      %v139 = vpop.xlane.xlu0 %138
      %140 = vadd.xlane.f32.xlu0 %v130
      %v141 = vpop.xlane.xlu0 %140
      %142 = vadd.xlane.f32.xlu0 %v131
      %v143 = vpop.xlane.xlu0 %142
      %144 = vadd.xlane.f32.xlu0 %v132
      %v145 = vpop.xlane.xlu0 %144
      %146 = vadd.xlane.f32.xlu0 %v133
      %v147 = vpop.xlane.xlu0 %146
      %148 = vadd.xlane.f32.xlu0 %v134
      %v149 = vpop.xlane.xlu0 %148
      %150 = vadd.xlane.f32.xlu0 %v135
      %v151 = vpop.xlane.xlu0 %150
      %v152 = vmax.f32 %v137, 1e-24
      %v153 = vmax.f32 %v139, 1e-24
      %v154 = vmax.f32 %v141, 1e-24
      %v155 = vmax.f32 %v143, 1e-24
      %v156 = vmax.f32 %v145, 1e-24
      %v157 = vmax.f32 %v147, 1e-24
      %v158 = vmax.f32 %v149, 1e-24
      %v159 = vmax.f32 %v151, 1e-24
      %v160 = vrsqrt.pop %v152
      %v161 = vrsqrt.pop %v153
      %v162 = vrsqrt.pop %v154
      %v163 = vrsqrt.pop %v155
      %v164 = vrsqrt.pop %v156
      %v165 = vrsqrt.pop %v157
      %v166 = vrsqrt.pop %v158
      %v167 = vrsqrt.pop %v159
      %v168 = vmul.f32 %v120, %v160
      %v169 = vmul.f32 %v121, %v161
      %v170 = vmul.f32 %v122, %v162
      %v171 = vmul.f32 %v123, %v163
      %v172 = vmul.f32 %v124, %v164
      %v173 = vmul.f32 %v125, %v165
      %v174 = vmul.f32 %v126, %v166
      %v175 = vmul.f32 %v127, %v167
      %v176 = vpack.c.bf16 %v169, %v168
      %v177 = vpack.c.bf16 %v171, %v170
      %v178 = vpack.c.bf16 %v173, %v172
      %v179 = vpack.c.bf16 %v175, %v174
      %v184 = vunpack.c.l.b16 %v176
      %v185 = vunpack.c.h.b16 %v176
      %v186 = vunpack.c.l.b16 %v177
      %v187 = vunpack.c.h.b16 %v177
      %v188 = vunpack.c.l.b16 %v178
      %v189 = vunpack.c.h.b16 %v178
      %v190 = vunpack.c.l.b16 %v179
      %v191 = vunpack.c.h.b16 %v179
      %v192 = vpack.c.b16 %v184, %v184
      %v193 = vpack.c.b16 %v185, %v185
      %v194 = vpack.c.b16 %v186, %v186
      %v195 = vpack.c.b16 %v187, %v187
      %v196 = vpack.c.b16 %v188, %v188
      %v197 = vpack.c.b16 %v189, %v189
      %v198 = vpack.c.b16 %v190, %v190
      %v199 = vpack.c.b16 %v191, %v191
      %208 = vst [vmem:[%s118] sm:$0xf] %v192
      %209 = vst [vmem:[%s118 + $0x4] sm:$0xf] %v193
      %210 = vst [vmem:[%s118 + $0x8] sm:$0xf] %v194
      %211 = vst [vmem:[%s118 + $0xc] sm:$0xf] %v195
      %212 = vst [vmem:[%s118 + $0x10] sm:$0xf] %v196
      %213 = vst [vmem:[%s118 + $0x14] sm:$0xf] %v197
      %214 = vst [vmem:[%s118 + $0x18] sm:$0xf] %v198
      %215 = vst [vmem:[%s118 + $0x1c] sm:$0xf] %v199
      %s216 = smul.u32 8, %s12
      %p217 = scmp.lt.s32.totalorder %s216, 15
      %s218 = scalar_select %p217, %s216, 15
      %s219 = smul.addr %s218, 4
      %s220 = scalar_lea.vmem %s1, %s219
      // Predicated region
      $region25: #{madacos_forward.4} parent=23 // pred_check
        %p221 = pneg %p56
      $region26: #{madacos_forward.4} parent=23 // pred_check_branch
        %223 = sbr.rel (%p221) target = $region28
      $region27: #{madacos_forward.4} parent=23 // pred_region
        %s224 = smul.u32 8, %s12
      $region28: #{madacos_forward.4} parent=23 // pred_fallthru
        _
    $region24: #{madacos_forward.4} parent=5 // pred_fallthru
      _
    %p225 = scmp.le.s32.totalorder 2, %s7
    // Predicated region
    $region29: #{madacos_forward.4} parent=5 // pred_check
      %p226 = pneg %p225
    $region30: #{madacos_forward.4} parent=5 // pred_check_branch
      %228 = sbr.rel (%p226) target = $region32
    $region31: #{madacos_forward.4} parent=5 // pred_region
      %s229 = ssub.s32 %s7, 2
      // Predicated region
      $region33: #{madacos_forward.4} parent=31 // pred_check
        %p230 = pneg %p62
      $region34: #{madacos_forward.4} parent=31 // pred_check_branch
        %232 = sbr.rel (%p230) target = $region36
      $region35: #{madacos_forward.4} parent=31 // pred_region
        %s233 = smul.u32 8, %s13
        %p234 = scmp.lt.s32.totalorder %s233, 15
        %s235 = scalar_select %p234, %s233, 15
        %s236 = smul.addr %s235, 4
        %s237 = scalar_lea.vmem %s1, %s236
      $region36: #{madacos_forward.4} parent=31 // pred_fallthru
        _
    $region32: #{madacos_forward.4} parent=5 // pred_fallthru
      _
  $region6: #{madacos_forward.4} parent=0 // loop_footer
    %s11 = sadd.s32 1, %s7
  $region7: #{madacos_forward.4} parent=0 // loop_footer_branch
    %6 = sbr.rel target = $region3
  $region8: #{madacos_forward.4} parent=0 // loop_exit
    _

// kernel: madacos_forward.6
$region0: #{madacos_forward.6}
  #allocation0 [shape = 'u32[]', space=smem, size = 0x4, offset = 0x4, fixed_abs, tag = 'smem constant byte address 0x4 - core index']
  #allocation1 [shape = 'u32[144,128]{1,0:T(1,128)}', space=vmem, size = 0x12000, scoped, tag = 'internal scratch']
  #allocation2 [shape = 'f32[64,128]{1,0:T(8,128)}', space=vmem, size = 0x8000, scoped, tag = 'scratch operand']
  #allocation3 [shape = 'f32[64,1]{1,0:T(8,128)}', space=vmem, size = 0x8000, scoped, tag = 'scratch operand']
  %s0 = inlined_call_operand.vmem [shape: s32[128,1], index: 0, kind: input, shape index: {}]
  %s1 = inlined_call_operand.vmem [shape: bf16[128,128], index: 1, kind: input, shape index: {}]
  %s2 = inlined_call_operand.vmem [shape: bf16[128,128], index: 2, kind: input, shape index: {}]
  %s3 = inlined_call_operand.vmem [shape: bf16[128,128], index: 3, kind: output, shape index: {0}]
  %s4 = inlined_call_operand.vmem [shape: f32[128,1], index: 4, kind: output, shape index: {1}]
  %5 = xla_tuple %s3, %s4
  %s6 = sld [smem:[#allocation0]]
  $region69: #{madacos_forward.6} parent=0
    _
  %s8 = ssub.s32 1, %s6
  %s9 = scalar_select 0, %s8, %s6
  loop: start=0, step=1, limit=4
  $region2: #{madacos_forward.6} parent=0 // loop_pre_header
    _
  $region3: #{madacos_forward.6} parent=0 // loop_header
    %s11 = sphi 0, %s15
    %p12 = scmp.ge.s32.totalorder %s11, 4
    %s18 = sphi 0, %s37
    %s19 = sphi 0, %s33
    %s20 = sphi 0, %s29
    %s21 = sphi 0, %s18
    %s22 = sphi 0, %s19
    %s23 = sphi 0, %s20
    %s24 = sphi 0, %s21
    %s25 = sphi 0, %s22
    %s26 = sphi 0, %s23
    %s40 = sphi 0, %s42
    %s43 = sphi 0, %s40
    %s44 = sphi 0, %s43
    %s60 = sphi 0, %s44
    %s68 = sphi 0, %s70
    %s71 = sphi 0, %s68
    %s72 = sphi 0, %s71
    %s88 = sphi 0, %s72
    %s96 = sphi 0, %s98
    %s99 = sphi 0, %s96
    %s100 = sphi 0, %s99
    %s116 = sphi 0, %s100
    %s124 = sphi 0, %s126
    %s127 = sphi 0, %s124
    %s128 = sphi 0, %s127
    %s144 = sphi 0, %s128
    %s150 = sphi 0, %s152
    %s153 = sphi 0, %s150
    %s154 = sphi 0, %s153
    %s170 = sphi 0, %s154
  $region4: #{madacos_forward.6} parent=0 // loop_header_branch
    %14 = sbr.rel (%p12) target = $region8
  $region5: #{madacos_forward.6} parent=0 // loop_body
    %s16 = ssub.s32 %s11, 1
    %s17 = ssub.s32 %s11, 2
    %s27 = sadd.s32 1, %s20
    %p28 = scmp.ge.s32.totalorder %s27, 1
    %s29 = scalar_select %p28, 0, %s27
    %s30 = sadd.s32 1, %s19
    %s31 = scalar_select %p28, %s30, %s19
    %p32 = scmp.ge.s32.totalorder %s31, 1
    %s33 = scalar_select %p32, 0, %s31
    %s34 = sadd.s32 1, %s18
    %s35 = scalar_select %p32, %s34, %s18
    %p36 = scmp.ge.s32.totalorder %s35, 2
    %s37 = scalar_select %p36, 0, %s35
    %s38 = ssub.s32 %s18, %s37
    %p39 = scmp.eq.s32.totalorder %s38, 0
    %s41 = sadd.s32 %s40, 1
    %s42 = scalar_select %p39, %s40, %s41
    %p45 = pneg %p39
    %p46 = scmp.eq.s32.totalorder %s11, 1
    %p47 = por %p45, %p46
    %p48 = scmp.ne.s32.totalorder %s40, %s43
    %p49 = scmp.eq.s32.totalorder %s11, 0
    %p50 = por %p48, %p49
    %p51 = scmp.ne.s32.totalorder %s40, %s43
    %p52 = scmp.eq.s32.totalorder %s16, 1
    %p53 = por %p51, %p52
    %p54 = scmp.ne.s32.totalorder %s43, %s44
    %p55 = scmp.eq.s32.totalorder %s16, 0
    %p56 = por %p54, %p55
    %p57 = scmp.ne.s32.totalorder %s43, %s44
    %p58 = scmp.eq.s32.totalorder %s17, 1
    %p59 = por %p57, %p58
    %p61 = scmp.ne.s32.totalorder %s44, %s60
    %p62 = scmp.eq.s32.totalorder %s17, 0
    %p63 = por %p61, %p62
    %s64 = ssub.s32 %s18, %s37
    %s65 = ssub.s32 %s20, %s29
    %s66 = sor.u32 %s64, %s65
    %p67 = scmp.eq.s32.totalorder %s66, 0
    %s69 = sadd.s32 %s68, 1
    %s70 = scalar_select %p67, %s68, %s69
    %p73 = pneg %p67
    %p74 = scmp.eq.s32.totalorder %s11, 1
    %p75 = por %p73, %p74
    %p76 = scmp.ne.s32.totalorder %s68, %s71
    %p77 = scmp.eq.s32.totalorder %s11, 0
    %p78 = por %p76, %p77
    %p79 = scmp.ne.s32.totalorder %s68, %s71
    %p80 = scmp.eq.s32.totalorder %s16, 1
    %p81 = por %p79, %p80
    %p82 = scmp.ne.s32.totalorder %s71, %s72
    %p83 = scmp.eq.s32.totalorder %s16, 0
    %p84 = por %p82, %p83
    %p85 = scmp.ne.s32.totalorder %s71, %s72
    %p86 = scmp.eq.s32.totalorder %s17, 1
    %p87 = por %p85, %p86
    %p89 = scmp.ne.s32.totalorder %s72, %s88
    %p90 = scmp.eq.s32.totalorder %s17, 0
    %p91 = por %p89, %p90
    %s92 = ssub.s32 %s20, %s29
    %s93 = ssub.s32 %s19, %s33
    %s94 = sor.u32 %s92, %s93
    %p95 = scmp.eq.s32.totalorder %s94, 0
    %s97 = sadd.s32 %s96, 1
    %s98 = scalar_select %p95, %s96, %s97
    %p101 = pneg %p95
    %p102 = scmp.eq.s32.totalorder %s11, 1
    %p103 = por %p101, %p102
    %p104 = scmp.ne.s32.totalorder %s96, %s99
    %p105 = scmp.eq.s32.totalorder %s11, 0
    %p106 = por %p104, %p105
    %p107 = scmp.ne.s32.totalorder %s96, %s99
    %p108 = scmp.eq.s32.totalorder %s16, 1
    %p109 = por %p107, %p108
    %p110 = scmp.ne.s32.totalorder %s99, %s100
    %p111 = scmp.eq.s32.totalorder %s16, 0
    %p112 = por %p110, %p111
    %p113 = scmp.ne.s32.totalorder %s99, %s100
    %p114 = scmp.eq.s32.totalorder %s17, 1
    %p115 = por %p113, %p114
    %p117 = scmp.ne.s32.totalorder %s100, %s116
    %p118 = scmp.eq.s32.totalorder %s17, 0
    %p119 = por %p117, %p118
    %s120 = ssub.s32 %s18, %s37
    %s121 = ssub.s32 %s19, %s33
    %s122 = sor.u32 %s120, %s121
    %p123 = scmp.eq.s32.totalorder %s122, 0
    %s125 = sadd.s32 %s124, 1
    %s126 = scalar_select %p123, %s124, %s125
    %p129 = pneg %p123
    %p130 = scmp.eq.s32.totalorder %s11, 1
    %p131 = por %p129, %p130
    %p132 = scmp.ne.s32.totalorder %s124, %s127
    %p133 = scmp.eq.s32.totalorder %s11, 0
    %p134 = por %p132, %p133
    %p135 = scmp.ne.s32.totalorder %s124, %s127
    %p136 = scmp.eq.s32.totalorder %s16, 1
    %p137 = por %p135, %p136
    %p138 = scmp.ne.s32.totalorder %s127, %s128
    %p139 = scmp.eq.s32.totalorder %s16, 0
    %p140 = por %p138, %p139
    %p141 = scmp.ne.s32.totalorder %s127, %s128
    %p142 = scmp.eq.s32.totalorder %s17, 1
    %p143 = por %p141, %p142
    %p145 = scmp.ne.s32.totalorder %s128, %s144
    %p146 = scmp.eq.s32.totalorder %s17, 0
    %p147 = por %p145, %p146
    %s148 = ssub.s32 %s18, %s37
    %p149 = scmp.eq.s32.totalorder %s148, 0
    %s151 = sadd.s32 %s150, 1
    %s152 = scalar_select %p149, %s150, %s151
    %p155 = pneg %p149
    %p156 = scmp.eq.s32.totalorder %s11, 1
    %p157 = por %p155, %p156
    %p158 = scmp.ne.s32.totalorder %s150, %s153
    %p159 = scmp.eq.s32.totalorder %s11, 0
    %p160 = por %p158, %p159
    %p161 = scmp.ne.s32.totalorder %s150, %s153
    %p162 = scmp.eq.s32.totalorder %s16, 1
    %p163 = por %p161, %p162
    %p164 = scmp.ne.s32.totalorder %s153, %s154
    %p165 = scmp.eq.s32.totalorder %s16, 0
    %p166 = por %p164, %p165
    %p167 = scmp.ne.s32.totalorder %s153, %s154
    %p168 = scmp.eq.s32.totalorder %s17, 1
    %p169 = por %p167, %p168
    %p171 = scmp.ne.s32.totalorder %s154, %s170
    %p172 = scmp.eq.s32.totalorder %s17, 0
    %p173 = por %p171, %p172
    %p174 = scmp.le.s32.totalorder 1, %s11
    %p175 = scmp.lt.s32.totalorder %s11, 3
    %p176 = pnand %p174, %p175
    %p177 = pneg %p176
    // Predicated region
    $region9: #{madacos_forward.6} parent=5 // pred_check
      _
    $region10: #{madacos_forward.6} parent=5 // pred_check_branch
      %179 = sbr.rel (%p176) target = $region12
    $region11: #{madacos_forward.6} parent=5 // pred_region
      %s180 = ssub.s32 %s11, 1
      // Predicated region
      $region13: #{madacos_forward.6} parent=11 // pred_check
        %p181 = pneg %p112
      $region14: #{madacos_forward.6} parent=11 // pred_check_branch
        %183 = sbr.rel (%p181) target = $region16
      $region15: #{madacos_forward.6} parent=11 // pred_region
        %s184 = smul.u32 16, %s23
        %p185 = scmp.lt.s32.totalorder %s184, 15
        %s186 = scalar_select %p185, %s184, 15
        %p187 = scmp.lt.s32.totalorder %s22, 0
        %s188 = scalar_select %p187, %s22, 0
        %s189 = sadd.s32 %s188, %s186
        %s190 = smul.addr %s189, 4
        %s191 = scalar_lea.vmem %s2, %s190
        %s192 = smul.u32 16, %s23
      $region16: #{madacos_forward.6} parent=11 // pred_fallthru
        _
    $region12: #{madacos_forward.6} parent=5 // pred_fallthru
      _
    %p193 = scmp.lt.s32.totalorder %s11, 2
    // Predicated region
    $region17: #{madacos_forward.6} parent=5 // pred_check
      %p194 = pneg %p193
    $region18: #{madacos_forward.6} parent=5 // pred_check_branch
      %196 = sbr.rel (%p194) target = $region20
    $region19: #{madacos_forward.6} parent=5 // pred_region
      // Predicated region
      $region21: #{madacos_forward.6} parent=19 // pred_check
        %p197 = pneg %p50
      $region22: #{madacos_forward.6} parent=19 // pred_check_branch
        %199 = sbr.rel (%p197) target = $region24
      $region23: #{madacos_forward.6} parent=19 // pred_region
        %s200 = smul.u32 8, %s18
        %p201 = scmp.lt.s32.totalorder %s200, 15
        %s202 = scalar_select %p201, %s200, 15
        %s203 = smul.addr %s202, 8
        %s204 = scalar_lea.vmem %s0, %s203
        %s205 = smul.u32 8, %s18
      $region24: #{madacos_forward.6} parent=19 // pred_fallthru
        _
      // Predicated region
      $region25: #{madacos_forward.6} parent=19 // pred_check
        %p206 = pneg %p78
      $region26: #{madacos_forward.6} parent=19 // pred_check_branch
        %208 = sbr.rel (%p206) target = $region28
      $region27: #{madacos_forward.6} parent=19 // pred_region
        %s209 = smul.u32 8, %s18
        %p210 = scmp.lt.s32.totalorder %s209, 15
        %s211 = scalar_select %p210, %s209, 15
        %p212 = scmp.lt.s32.totalorder %s20, 0
        %s213 = scalar_select %p212, %s20, 0
        %s214 = sadd.s32 %s213, %s211
        %s215 = smul.addr %s214, 4
        %s216 = scalar_lea.vmem %s1, %s215
        %s217 = smul.u32 8, %s18
      $region28: #{madacos_forward.6} parent=19 // pred_fallthru
        _
    $region20: #{madacos_forward.6} parent=5 // pred_fallthru
      _
    %p218 = scmp.le.s32.totalorder 1, %s11
    %p219 = scmp.lt.s32.totalorder %s11, 3
    %p220 = pnand %p218, %p219
    %p221 = pneg %p220
    // Predicated region
    $region29: #{madacos_forward.6} parent=5 // pred_check
      _
    $region30: #{madacos_forward.6} parent=5 // pred_check_branch
      %223 = sbr.rel (%p220) target = $region32
    $region31: #{madacos_forward.6} parent=5 // pred_region
      %s224 = ssub.s32 %s11, 1
      %s225 = smul.u32 8, %s21
      %p226 = scmp.lt.s32.totalorder %s225, 15
      %s227 = scalar_select %p226, %s225, 15
      %s228 = smul.addr %s227, 8
      %s229 = scalar_lea.vmem %s0, %s228
      %p230 = pneg %p56
      %p231 = pneg %p53
      %s232 = smul.u32 8, %s21
      %p233 = scmp.lt.s32.totalorder %s232, 15
      %s234 = scalar_select %p233, %s232, 15
      %p235 = scmp.lt.s32.totalorder %s23, 0
      %s236 = scalar_select %p235, %s23, 0
      %s237 = sadd.s32 %s236, %s234
      %s238 = smul.addr %s237, 4
      %s239 = scalar_lea.vmem %s1, %s238
      %p240 = pneg %p84
      %p241 = pneg %p81
      %s242 = smul.u32 16, %s23
      %p243 = scmp.lt.s32.totalorder %s242, 15
      %s244 = scalar_select %p243, %s242, 15
      %p245 = scmp.lt.s32.totalorder %s22, 0
      %s246 = scalar_select %p245, %s22, 0
      %s247 = sadd.s32 %s246, %s244
      %s248 = smul.addr %s247, 4
      %s249 = scalar_lea.vmem %s2, %s248
      %p250 = pneg %p112
      %p251 = pneg %p109
      %p252 = pneg %p140
      %p253 = pneg %p137
      %s254 = smul.u32 8, %s21
      %p255 = scmp.lt.s32.totalorder %s254, 15
      %s256 = scalar_select %p255, %s254, 15
      %p257 = scmp.lt.s32.totalorder %s22, 0
      %s258 = scalar_select %p257, %s22, 0
      %s259 = sadd.s32 %s258, %s256
      %s260 = smul.addr %s259, 4
      %s261 = scalar_lea.vmem %s3, %s260
      %p262 = pneg %p166
      %p263 = pneg %p163
      %s264 = smul.u32 8, %s21
      %p265 = scmp.lt.s32.totalorder %s264, 15
      %s266 = scalar_select %p265, %s264, 15
      %s267 = smul.addr %s266, 8
      %s268 = scalar_lea.vmem %s4, %s267
      %s269 = smul.u32 8, %s21
      %p270 = scmp.lt.s32.totalorder %s269, 15
      %s271 = scalar_select %p270, %s269, 15
      %s272 = smul.addr %s271, 8
      %s273 = scalar_lea.vmem %s0, %s272
      %s274 = smul.u32 8, %s21
      %s275 = smul.u32 8, %s21
      %p276 = scmp.lt.s32.totalorder %s275, 15
      %s277 = scalar_select %p276, %s275, 15
      %p278 = scmp.lt.s32.totalorder %s23, 0
      %s279 = scalar_select %p278, %s23, 0
      %s280 = sadd.s32 %s279, %s277
      %s281 = smul.addr %s280, 4
      %s282 = scalar_lea.vmem %s1, %s281
      %s283 = smul.u32 8, %s21
      %s284 = smul.u32 16, %s23
      %p285 = scmp.lt.s32.totalorder %s284, 15
      %s286 = scalar_select %p285, %s284, 15
      %p287 = scmp.lt.s32.totalorder %s22, 0
      %s288 = scalar_select %p287, %s22, 0
      %s289 = sadd.s32 %s288, %s286
      %s290 = smul.addr %s289, 4
      %s291 = scalar_lea.vmem %s2, %s290
      %s292 = smul.u32 16, %s23
      %s293 = smul.u32 8, %s21
      %p294 = scmp.lt.s32.totalorder %s293, 15
      %s295 = scalar_select %p294, %s293, 15
      %p296 = scmp.lt.s32.totalorder %s22, 0
      %s297 = scalar_select %p296, %s22, 0
      %s298 = sadd.s32 %s297, %s295
      %s299 = smul.addr %s298, 4
      %s300 = scalar_lea.vmem %s3, %s299
      %s301 = smul.u32 8, %s21
      %s302 = smul.u32 8, %s21
      %p303 = scmp.lt.s32.totalorder %s302, 15
      %s304 = scalar_select %p303, %s302, 15
      %s305 = smul.addr %s304, 8
      %s306 = scalar_lea.vmem %s4, %s305
      %s307 = smul.u32 8, %s21
      %p309 = scmp.eq.s32.totalorder %s23, 0
      // Predicated region
      $region33: #{madacos_forward.6} parent=31 // pred_check
        %p310 = pneg %p309
      $region34: #{madacos_forward.6} parent=31 // pred_check_branch
        %312 = sbr.rel (%p310) target = $region36
      $region35: #{madacos_forward.6} parent=31 // pred_region
        %313 = vst [vmem:[#allocation2] sm:$0xff] 0.0
        %314 = vst [vmem:[#allocation2 + $0x8] sm:$0xff] 0.0
        %315 = vst [vmem:[#allocation2 + $0x10] sm:$0xff] 0.0
        %316 = vst [vmem:[#allocation2 + $0x18] sm:$0xff] 0.0
        %317 = vst [vmem:[#allocation2 + $0x20] sm:$0xff] 0.0
        %318 = vst [vmem:[#allocation2 + $0x28] sm:$0xff] 0.0
        %319 = vst [vmem:[#allocation2 + $0x30] sm:$0xff] 0.0
        %320 = vst [vmem:[#allocation2 + $0x38] sm:$0xff] 0.0
      $region36: #{madacos_forward.6} parent=31 // pred_fallthru
        _
      %v321 = vld [vmem:[#allocation2] sm:$0xff]
      %v322 = vld [vmem:[#allocation2 + $0x8] sm:$0xff]
      %v323 = vld [vmem:[#allocation2 + $0x10] sm:$0xff]
      %v324 = vld [vmem:[#allocation2 + $0x18] sm:$0xff]
      %v325 = vld [vmem:[#allocation2 + $0x20] sm:$0xff]
      %v326 = vld [vmem:[#allocation2 + $0x28] sm:$0xff]
      %v327 = vld [vmem:[#allocation2 + $0x30] sm:$0xff]
      %v328 = vld [vmem:[#allocation2 + $0x38] sm:$0xff]
      %v329 = vld [vmem:[%s282] sm:$0xf]
      %v330 = vld [vmem:[%s282 + $0x4] sm:$0xf]
      %v331 = vld [vmem:[%s282 + $0x8] sm:$0xf]
      %v332 = vld [vmem:[%s282 + $0xc] sm:$0xf]
      %v333 = vld [vmem:[%s282 + $0x10] sm:$0xf]
      %v334 = vld [vmem:[%s282 + $0x14] sm:$0xf]
      %v335 = vld [vmem:[%s282 + $0x18] sm:$0xf]
      %v336 = vld [vmem:[%s282 + $0x1c] sm:$0xf]
      %v337 = vld [vmem:[%s291] sm:$0xf]
      %v338 = vld [vmem:[%s291 + $0x4] sm:$0xf]
      %v339 = vld [vmem:[%s291 + $0x8] sm:$0xf]
      %v340 = vld [vmem:[%s291 + $0xc] sm:$0xf]
      %v341 = vld [vmem:[%s291 + $0x10] sm:$0xf]
      %v342 = vld [vmem:[%s291 + $0x14] sm:$0xf]
      %v343 = vld [vmem:[%s291 + $0x18] sm:$0xf]
      %v344 = vld [vmem:[%s291 + $0x1c] sm:$0xf]
      %v345 = vld [vmem:[%s291 + $0x20] sm:$0xf]
      %v346 = vld [vmem:[%s291 + $0x24] sm:$0xf]
      %v347 = vld [vmem:[%s291 + $0x28] sm:$0xf]
      %v348 = vld [vmem:[%s291 + $0x2c] sm:$0xf]
      %v349 = vld [vmem:[%s291 + $0x30] sm:$0xf]
      %v350 = vld [vmem:[%s291 + $0x34] sm:$0xf]
      %v351 = vld [vmem:[%s291 + $0x38] sm:$0xf]
      %v352 = vld [vmem:[%s291 + $0x3c] sm:$0xf]
      %v361 = vunpack.c.l.b16 %v329
      %v362 = vunpack.c.l.b16 %v330
      %v363 = vunpack.c.l.b16 %v331
      %v364 = vunpack.c.l.b16 %v332
      %v365 = vunpack.c.l.b16 %v333
      %v366 = vunpack.c.l.b16 %v334
      %v367 = vunpack.c.l.b16 %v335
      %v368 = vunpack.c.l.b16 %v336
      %v369 = vpack.c.b16 %v362, %v361
      %v370 = vpack.c.b16 %v364, %v363
      %v371 = vpack.c.b16 %v366, %v365
      %v372 = vpack.c.b16 %v368, %v367
      %v393 = vunpack.c.l.b16 %v337
      %v394 = vunpack.c.l.b16 %v338
      %v395 = vunpack.c.l.b16 %v339
      %v396 = vunpack.c.l.b16 %v340
      %v397 = vunpack.c.l.b16 %v341
      %v398 = vunpack.c.l.b16 %v342
      %v399 = vunpack.c.l.b16 %v343
      %v400 = vunpack.c.l.b16 %v344
      %v401 = vunpack.c.l.b16 %v345
      %v402 = vunpack.c.l.b16 %v346
      %v403 = vunpack.c.l.b16 %v347
      %v404 = vunpack.c.l.b16 %v348
      %v405 = vunpack.c.l.b16 %v349
      %v406 = vunpack.c.l.b16 %v350
      %v407 = vunpack.c.l.b16 %v351
      %v408 = vunpack.c.l.b16 %v352
      %v409 = vpack.c.b16 %v394, %v393
      %v410 = vpack.c.b16 %v396, %v395
      %v411 = vpack.c.b16 %v398, %v397
      %v412 = vpack.c.b16 %v400, %v399
      %v413 = vpack.c.b16 %v402, %v401
      %v414 = vpack.c.b16 %v404, %v403
      %v415 = vpack.c.b16 %v406, %v405
      %v416 = vpack.c.b16 %v408, %v407
      %425 = vmatprep.subr.bf16.mxu0 0
      %426 = vmatpush1.bf16.msra.mxu0 %v416
      %427 = vmatprep.subr.bf16.mxu0 0
      %428 = vmatpush1.bf16.msra.mxu0 %v415
      %429 = vmatprep.subr.bf16.mxu0 0
      %430 = vmatpush1.bf16.msra.mxu0 %v414
      %431 = vmatprep.subr.bf16.mxu0 0
      %432 = vmatpush1.bf16.msra.mxu0 %v413
      %433 = vmatprep.subr.bf16.mxu0 0
      %434 = vmatpush1.bf16.msra.mxu0 %v412
      %435 = vmatprep.subr.bf16.mxu0 0
      %436 = vmatpush1.bf16.msra.mxu0 %v411
      %437 = vmatprep.subr.bf16.mxu0 0
      %438 = vmatpush1.bf16.msra.mxu0 %v410
      %439 = vmatprep.subr.bf16.mxu0 0
      %440 = vmatpush1.bf16.msra.mxu0 %v409
      %441 = vmatprep.subr.bf16.mxu0 0
      %442 = vmatpush2.bf16.msra.mxu0 0
      %443 = vmatprep.subr.bf16.mxu0 0
      %444 = vmatpush2.bf16.msra.mxu0 0
      %445 = vmatprep.subr.bf16.mxu0 0
      %446 = vmatpush2.bf16.msra.mxu0 0
      %447 = vmatprep.subr.bf16.mxu0 0
      %448 = vmatpush2.bf16.msra.mxu0 0
      %449 = vmatprep.subr.bf16.mxu0 0
      %450 = vmatpush2.bf16.msra.mxu0 0
      %451 = vmatprep.subr.bf16.mxu0 0
      %452 = vmatpush2.bf16.msra.mxu0 0
      %453 = vmatprep.subr.bf16.mxu0 0
      %454 = vmatpush2.bf16.msra.mxu0 0
      %455 = vmatprep.subr.bf16.mxu0 0
      %456 = vmatpush2.bf16.msra.mxu0 0
      %457 = vmatprep.mubr.bf16.mxu0 0
      %458 = vmatmul.mubr.bf16.gmra.mxu0 %v369
      %v459 = vpop.f32.mrf.mxu0
      %v460 = vadd.f32 0.0, %v459
      %v461 = vpop.f32.mrf.mxu0
      %v462 = vpop.f32.mrf.mxu0
      %v463 = vadd.f32 0.0, %v462
      %v464 = vpop.f32.mrf.mxu0
      %465 = vmatprep.mubr.bf16.mxu0 0
      %466 = vmatmul.mubr.bf16.gmra.mxu0 %v370
      %v467 = vpop.f32.mrf.mxu0
      %v468 = vadd.f32 0.0, %v467
      %v469 = vpop.f32.mrf.mxu0
      %v470 = vpop.f32.mrf.mxu0
      %v471 = vadd.f32 0.0, %v470
      %v472 = vpop.f32.mrf.mxu0
      %473 = vmatprep.mubr.bf16.mxu0 0
      %474 = vmatmul.mubr.bf16.gmra.mxu0 %v371
      %v475 = vpop.f32.mrf.mxu0
      %v476 = vadd.f32 0.0, %v475
      %v477 = vpop.f32.mrf.mxu0
      %v478 = vpop.f32.mrf.mxu0
      %v479 = vadd.f32 0.0, %v478
      %v480 = vpop.f32.mrf.mxu0
      %481 = vmatprep.mubr.bf16.mxu0 0
      %482 = vmatmul.mubr.bf16.gmra.mxu0 %v372
      %v483 = vpop.f32.mrf.mxu0
      %v484 = vadd.f32 0.0, %v483
      %v485 = vpop.f32.mrf.mxu0
      %v486 = vpop.f32.mrf.mxu0
      %v487 = vadd.f32 0.0, %v486
      %v488 = vpop.f32.mrf.mxu0
      %489 = vdwg.mxu0
      %v490 = vadd.f32 %v321, %v460
      %v491 = vadd.f32 %v322, %v463
      %v492 = vadd.f32 %v323, %v468
      %v493 = vadd.f32 %v324, %v471
      %v494 = vadd.f32 %v325, %v476
      %v495 = vadd.f32 %v326, %v479
      %v496 = vadd.f32 %v327, %v484
      %v497 = vadd.f32 %v328, %v487
      %498 = vst [vmem:[#allocation2] sm:$0xff] %v490
      %499 = vst [vmem:[#allocation2 + $0x8] sm:$0xff] %v491
      %500 = vst [vmem:[#allocation2 + $0x10] sm:$0xff] %v492
      %501 = vst [vmem:[#allocation2 + $0x18] sm:$0xff] %v493
      %502 = vst [vmem:[#allocation2 + $0x20] sm:$0xff] %v494
      %503 = vst [vmem:[#allocation2 + $0x28] sm:$0xff] %v495
      %504 = vst [vmem:[#allocation2 + $0x30] sm:$0xff] %v496
      %505 = vst [vmem:[#allocation2 + $0x38] sm:$0xff] %v497
      // Predicated region
      $region37: #{madacos_forward.6} parent=31 // pred_check
        %p506 = pneg %p309
      $region38: #{madacos_forward.6} parent=31 // pred_check_branch
        %508 = sbr.rel (%p506) target = $region40
      $region39: #{madacos_forward.6} parent=31 // pred_region
        %v509 = vld [vmem:[#allocation2] sm:$0xff]
        %v510 = vld [vmem:[#allocation2 + $0x8] sm:$0xff]
        %v511 = vld [vmem:[#allocation2 + $0x10] sm:$0xff]
        %v512 = vld [vmem:[#allocation2 + $0x18] sm:$0xff]
        %v513 = vld [vmem:[#allocation2 + $0x20] sm:$0xff]
        %v514 = vld [vmem:[#allocation2 + $0x28] sm:$0xff]
        %v515 = vld [vmem:[#allocation2 + $0x30] sm:$0xff]
        %v516 = vld [vmem:[#allocation2 + $0x38] sm:$0xff]
        %v517 = vpack.c.bf16 %v510, %v509
        %v518 = vpack.c.bf16 %v512, %v511
        %v519 = vpack.c.bf16 %v514, %v513
        %v520 = vpack.c.bf16 %v516, %v515
        %v525 = vunpack.c.l.b16 %v517
        %v526 = vunpack.c.h.b16 %v517
        %v527 = vunpack.c.l.b16 %v518
        %v528 = vunpack.c.h.b16 %v518
        %v529 = vunpack.c.l.b16 %v519
        %v530 = vunpack.c.h.b16 %v519
        %v531 = vunpack.c.l.b16 %v520
        %v532 = vunpack.c.h.b16 %v520
        %v533 = vpack.c.b16 %v525, %v525
        %v534 = vpack.c.b16 %v526, %v526
        %v535 = vpack.c.b16 %v527, %v527
        %v536 = vpack.c.b16 %v528, %v528
        %v537 = vpack.c.b16 %v529, %v529
        %v538 = vpack.c.b16 %v530, %v530
        %v539 = vpack.c.b16 %v531, %v531
        %v540 = vpack.c.b16 %v532, %v532
        %549 = vst [vmem:[%s300] sm:$0xf] %v533
        %550 = vst [vmem:[%s300 + $0x4] sm:$0xf] %v534
        %551 = vst [vmem:[%s300 + $0x8] sm:$0xf] %v535
        %552 = vst [vmem:[%s300 + $0xc] sm:$0xf] %v536
        %553 = vst [vmem:[%s300 + $0x10] sm:$0xf] %v537
        %554 = vst [vmem:[%s300 + $0x14] sm:$0xf] %v538
        %555 = vst [vmem:[%s300 + $0x18] sm:$0xf] %v539
        %556 = vst [vmem:[%s300 + $0x1c] sm:$0xf] %v540
        %v557 = vlaneseq
        %v558 = vand.u32 %v557, 127
        %s559 = smul.u32 %s22, 128
        %v560 = vstv %s559
        %v561 = vadd.s32 %v558, %v560
        %v562 = vld [vmem:[%s273] sm:$0xff]
        %v563 = vld [vmem:[%s273 + $0x8] sm:$0xff]
        %v564 = vld [vmem:[%s273 + $0x10] sm:$0xff]
        %v565 = vld [vmem:[%s273 + $0x18] sm:$0xff]
        %v566 = vld [vmem:[%s273 + $0x20] sm:$0xff]
        %v567 = vld [vmem:[%s273 + $0x28] sm:$0xff]
        %v568 = vld [vmem:[%s273 + $0x30] sm:$0xff]
        %v569 = vld [vmem:[%s273 + $0x38] sm:$0xff]
        %570 = vset.pattern.permute.xlu0 0
        %571 = vperm.xlu0 %570, %v562
        %v572 = vpop.permute.xlu0 %571
        %573 = vset.pattern.permute.xlu0 0
        %574 = vperm.xlu0 %573, %v563
        %v575 = vpop.permute.xlu0 %574
        %576 = vset.pattern.permute.xlu0 0
        %577 = vperm.xlu0 %576, %v564
        %v578 = vpop.permute.xlu0 %577
        %579 = vset.pattern.permute.xlu0 0
        %580 = vperm.xlu0 %579, %v565
        %v581 = vpop.permute.xlu0 %580
        %582 = vset.pattern.permute.xlu0 0
        %583 = vperm.xlu0 %582, %v566
        %v584 = vpop.permute.xlu0 %583
        %585 = vset.pattern.permute.xlu0 0
        %586 = vperm.xlu0 %585, %v567
        %v587 = vpop.permute.xlu0 %586
        %588 = vset.pattern.permute.xlu0 0
        %589 = vperm.xlu0 %588, %v568
        %v590 = vpop.permute.xlu0 %589
        %591 = vset.pattern.permute.xlu0 0
        %592 = vperm.xlu0 %591, %v569
        %v593 = vpop.permute.xlu0 %592
        %vm594 = vcmp.eq.s32.totalorder %v561, %v572
        %vm595 = vcmp.eq.s32.totalorder %v561, %v575
        %vm596 = vcmp.eq.s32.totalorder %v561, %v578
        %vm597 = vcmp.eq.s32.totalorder %v561, %v581
        %vm598 = vcmp.eq.s32.totalorder %v561, %v584
        %vm599 = vcmp.eq.s32.totalorder %v561, %v587
        %vm600 = vcmp.eq.s32.totalorder %v561, %v590
        %vm601 = vcmp.eq.s32.totalorder %v561, %v593
        %p602 = scmp.eq.s32.totalorder %s22, 0
        // Predicated region
        $region41: #{madacos_forward.6} parent=39 // pred_check
          %p603 = pneg %p602
        $region42: #{madacos_forward.6} parent=39 // pred_check_branch
          %605 = sbr.rel (%p603) target = $region44
        $region43: #{madacos_forward.6} parent=39 // pred_region
          %vm606 = vcmask 7168
          %607 = vst.msk [vmem:[#allocation3] sm:$0xff] %vm606, 0.0
          %608 = vst.msk [vmem:[#allocation3 + $0x8] sm:$0xff] %vm606, 0.0
          %609 = vst.msk [vmem:[#allocation3 + $0x10] sm:$0xff] %vm606, 0.0
          %610 = vst.msk [vmem:[#allocation3 + $0x18] sm:$0xff] %vm606, 0.0
          %611 = vst.msk [vmem:[#allocation3 + $0x20] sm:$0xff] %vm606, 0.0
          %612 = vst.msk [vmem:[#allocation3 + $0x28] sm:$0xff] %vm606, 0.0
          %613 = vst.msk [vmem:[#allocation3 + $0x30] sm:$0xff] %vm606, 0.0
          %614 = vst.msk [vmem:[#allocation3 + $0x38] sm:$0xff] %vm606, 0.0
        $region44: #{madacos_forward.6} parent=39 // pred_fallthru
          _
        %v615 = vld [vmem:[#allocation3] sm:$0xff]
        %v616 = vld [vmem:[#allocation3 + $0x8] sm:$0xff]
        %v617 = vld [vmem:[#allocation3 + $0x10] sm:$0xff]
        %v618 = vld [vmem:[#allocation3 + $0x18] sm:$0xff]
        %v619 = vld [vmem:[#allocation3 + $0x20] sm:$0xff]
        %v620 = vld [vmem:[#allocation3 + $0x28] sm:$0xff]
        %v621 = vld [vmem:[#allocation3 + $0x30] sm:$0xff]
        %v622 = vld [vmem:[#allocation3 + $0x38] sm:$0xff]
        %v623 = vsel %vm594, %v509, 0.0
        %v624 = vsel %vm595, %v510, 0.0
        %v625 = vsel %vm596, %v511, 0.0
        %v626 = vsel %vm597, %v512, 0.0
        %v627 = vsel %vm598, %v513, 0.0
        %v628 = vsel %vm599, %v514, 0.0
        %v629 = vsel %vm600, %v515, 0.0
        %v630 = vsel %vm601, %v516, 0.0
        %631 = vadd.xlane.f32.xlu0 %v623
        %v632 = vpop.xlane.xlu0 %631
        %633 = vadd.xlane.f32.xlu0 %v624
        %v634 = vpop.xlane.xlu0 %633
        %635 = vadd.xlane.f32.xlu0 %v625
        %v636 = vpop.xlane.xlu0 %635
        %637 = vadd.xlane.f32.xlu0 %v626
        %v638 = vpop.xlane.xlu0 %637
        %639 = vadd.xlane.f32.xlu0 %v627
        %v640 = vpop.xlane.xlu0 %639
        %641 = vadd.xlane.f32.xlu0 %v628
        %v642 = vpop.xlane.xlu0 %641
        %643 = vadd.xlane.f32.xlu0 %v629
        %v644 = vpop.xlane.xlu0 %643
        %645 = vadd.xlane.f32.xlu0 %v630
        %v646 = vpop.xlane.xlu0 %645
        %v647 = vadd.f32 %v615, %v632
        %v648 = vadd.f32 %v616, %v634
        %v649 = vadd.f32 %v617, %v636
        %v650 = vadd.f32 %v618, %v638
        %v651 = vadd.f32 %v619, %v640
        %v652 = vadd.f32 %v620, %v642
        %v653 = vadd.f32 %v621, %v644
        %v654 = vadd.f32 %v622, %v646
        %vm655 = vcmask 7168
        %656 = vst.msk [vmem:[#allocation3] sm:$0xff] %vm655, %v647
        %657 = vst.msk [vmem:[#allocation3 + $0x8] sm:$0xff] %vm655, %v648
        %658 = vst.msk [vmem:[#allocation3 + $0x10] sm:$0xff] %vm655, %v649
        %659 = vst.msk [vmem:[#allocation3 + $0x18] sm:$0xff] %vm655, %v650
        %660 = vst.msk [vmem:[#allocation3 + $0x20] sm:$0xff] %vm655, %v651
        %661 = vst.msk [vmem:[#allocation3 + $0x28] sm:$0xff] %vm655, %v652
        %662 = vst.msk [vmem:[#allocation3 + $0x30] sm:$0xff] %vm655, %v653
        %663 = vst.msk [vmem:[#allocation3 + $0x38] sm:$0xff] %vm655, %v654
        // Predicated region
        $region45: #{madacos_forward.6} parent=39 // pred_check
          %p664 = pneg %p602
        $region46: #{madacos_forward.6} parent=39 // pred_check_branch
          %666 = sbr.rel (%p664) target = $region48
        $region47: #{madacos_forward.6} parent=39 // pred_region
          %v667 = vld [vmem:[#allocation3] sm:$0xff]
          %v668 = vld [vmem:[#allocation3 + $0x8] sm:$0xff]
          %v669 = vld [vmem:[#allocation3 + $0x10] sm:$0xff]
          %v670 = vld [vmem:[#allocation3 + $0x18] sm:$0xff]
          %v671 = vld [vmem:[#allocation3 + $0x20] sm:$0xff]
          %v672 = vld [vmem:[#allocation3 + $0x28] sm:$0xff]
          %v673 = vld [vmem:[#allocation3 + $0x30] sm:$0xff]
          %v674 = vld [vmem:[#allocation3 + $0x38] sm:$0xff]
          %675 = vst.msk [vmem:[%s306] sm:$0xff] %vm655, %v667
          %676 = vst.msk [vmem:[%s306 + $0x8] sm:$0xff] %vm655, %v668
          %677 = vst.msk [vmem:[%s306 + $0x10] sm:$0xff] %vm655, %v669
          %678 = vst.msk [vmem:[%s306 + $0x18] sm:$0xff] %vm655, %v670
          %679 = vst.msk [vmem:[%s306 + $0x20] sm:$0xff] %vm655, %v671
          %680 = vst.msk [vmem:[%s306 + $0x28] sm:$0xff] %vm655, %v672
          %681 = vst.msk [vmem:[%s306 + $0x30] sm:$0xff] %vm655, %v673
          %682 = vst.msk [vmem:[%s306 + $0x38] sm:$0xff] %vm655, %v674
        $region48: #{madacos_forward.6} parent=39 // pred_fallthru
          _
      $region40: #{madacos_forward.6} parent=31 // pred_fallthru
        _
      %s683 = smul.u32 8, %s21
      %p684 = scmp.lt.s32.totalorder %s683, 15
      %s685 = scalar_select %p684, %s683, 15
      %p686 = scmp.lt.s32.totalorder %s22, 0
      %s687 = scalar_select %p686, %s22, 0
      %s688 = sadd.s32 %s687, %s685
      %s689 = smul.addr %s688, 4
      %s690 = scalar_lea.vmem %s3, %s689
      %s691 = smul.u32 8, %s21
      %p692 = scmp.lt.s32.totalorder %s691, 15
      %s693 = scalar_select %p692, %s691, 15
      %s694 = smul.addr %s693, 8
      %s695 = scalar_lea.vmem %s4, %s694
      // Predicated region
      $region49: #{madacos_forward.6} parent=31 // pred_check
        %p696 = pneg %p137
      $region50: #{madacos_forward.6} parent=31 // pred_check_branch
        %698 = sbr.rel (%p696) target = $region52
      $region51: #{madacos_forward.6} parent=31 // pred_region
        %s699 = smul.u32 8, %s21
      $region52: #{madacos_forward.6} parent=31 // pred_fallthru
        _
      // Predicated region
      $region53: #{madacos_forward.6} parent=31 // pred_check
        %p700 = pneg %p163
      $region54: #{madacos_forward.6} parent=31 // pred_check_branch
        %702 = sbr.rel (%p700) target = $region56
      $region55: #{madacos_forward.6} parent=31 // pred_region
        %s703 = smul.u32 8, %s21
      $region56: #{madacos_forward.6} parent=31 // pred_fallthru
        _
    $region32: #{madacos_forward.6} parent=5 // pred_fallthru
      _
    %p704 = scmp.le.s32.totalorder 2, %s11
    // Predicated region
    $region57: #{madacos_forward.6} parent=5 // pred_check
      %p705 = pneg %p704
    $region58: #{madacos_forward.6} parent=5 // pred_check_branch
      %707 = sbr.rel (%p705) target = $region60
    $region59: #{madacos_forward.6} parent=5 // pred_region
      %s708 = ssub.s32 %s11, 2
      // Predicated region
      $region61: #{madacos_forward.6} parent=59 // pred_check
        %p709 = pneg %p143
      $region62: #{madacos_forward.6} parent=59 // pred_check_branch
        %711 = sbr.rel (%p709) target = $region64
      $region63: #{madacos_forward.6} parent=59 // pred_region
        %s712 = smul.u32 8, %s24
        %p713 = scmp.lt.s32.totalorder %s712, 15
        %s714 = scalar_select %p713, %s712, 15
        %p715 = scmp.lt.s32.totalorder %s25, 0
        %s716 = scalar_select %p715, %s25, 0
        %s717 = sadd.s32 %s716, %s714
        %s718 = smul.addr %s717, 4
        %s719 = scalar_lea.vmem %s3, %s718
      $region64: #{madacos_forward.6} parent=59 // pred_fallthru
        _
      // Predicated region
      $region65: #{madacos_forward.6} parent=59 // pred_check
        %p720 = pneg %p169
      $region66: #{madacos_forward.6} parent=59 // pred_check_branch
        %722 = sbr.rel (%p720) target = $region68
      $region67: #{madacos_forward.6} parent=59 // pred_region
        %s723 = smul.u32 8, %s24
        %p724 = scmp.lt.s32.totalorder %s723, 15
        %s725 = scalar_select %p724, %s723, 15
        %s726 = smul.addr %s725, 8
        %s727 = scalar_lea.vmem %s4, %s726
      $region68: #{madacos_forward.6} parent=59 // pred_fallthru
        _
    $region60: #{madacos_forward.6} parent=5 // pred_fallthru
      _
  $region6: #{madacos_forward.6} parent=0 // loop_footer
    %s15 = sadd.s32 1, %s11
  $region7: #{madacos_forward.6} parent=0 // loop_footer_branch
    %10 = sbr.rel target = $region3
  $region8: #{madacos_forward.6} parent=0 // loop_exit
    _

// kernel: madacos_forward.7
$region0: #{madacos_forward.7}
  #allocation0 [shape = 'u32[]', space=smem, size = 0x4, offset = 0x4, fixed_abs, tag = 'smem constant byte address 0x4 - core index']
  #allocation1 [shape = 'u32[144,128]{1,0:T(1,128)}', space=vmem, size = 0x12000, scoped, tag = 'internal scratch']
  %s0 = inlined_call_operand.vmem [shape: f32[2], index: 0, kind: input, shape index: {}]
  %s1 = inlined_call_operand.vmem [shape: s32[128,1], index: 1, kind: input, shape index: {}]
  %s2 = inlined_call_operand.vmem [shape: bf16[128,128], index: 2, kind: input, shape index: {}]
  %s3 = inlined_call_operand.vmem [shape: f32[128,128], index: 3, kind: output, shape index: {}]
  %s4 = sld [smem:[#allocation0]]
  $region26: #{madacos_forward.7} parent=0
    _
  %s6 = ssub.s32 1, %s4
  %s7 = scalar_select 0, %s6, %s4
  $region1: #{madacos_forward.7} parent=0
    #allocation2 [shape = 'u8[512]{0}', space=smem, size = 0x200, scoped, tag = 'input window, operand 0, single buffered']
    #allocation3 [shape = 's32[1]{0}', space=sflag, size = 0x4, scoped, tag = 'scoped memory for madacos_forward.7']
    %8 = vsyncpa [#allocation3], 0
    // Predicated region
    $region2: #{madacos_forward.7} parent=1 // pred_check
      _
    $region3: #{madacos_forward.7} parent=1 // pred_check_branch
      %10 = sbr.rel (0) target = $region5
    $region4: #{madacos_forward.7} parent=1 // pred_region
      %s12 = ssub.s32 16, 16
      %13 = vsyncadd [#allocation3], %s12
      %s15 = sshll.u32 %s0, 4
      %s16 = int_to_ptr.vmem [resolvable:$true] %s15
      %18 = dma.vmem_to_smem %s16, 16, [#allocation2], [#allocation3]
    $region5: #{madacos_forward.7} parent=1 // pred_fallthru
      _
    // Predicated region
    $region6: #{madacos_forward.7} parent=1 // pred_check
      _
    $region7: #{madacos_forward.7} parent=1 // pred_check_branch
      %20 = sbr.rel (0) target = $region9
    $region8: #{madacos_forward.7} parent=1 // pred_region
      _
    $region9: #{madacos_forward.7} parent=1 // pred_fallthru
      _
    // Predicated region
    $region10: #{madacos_forward.7} parent=1 // pred_check
      _
    $region11: #{madacos_forward.7} parent=1 // pred_check_branch
      %22 = sbr.rel (0) target = $region13
    $region12: #{madacos_forward.7} parent=1 // pred_region
      _
    $region13: #{madacos_forward.7} parent=1 // pred_fallthru
      _
    // Predicated region
    $region14: #{madacos_forward.7} parent=1 // pred_check
      _
    $region15: #{madacos_forward.7} parent=1 // pred_check_branch
      %24 = sbr.rel (0) target = $region17
    $region16: #{madacos_forward.7} parent=1 // pred_region
      %25 = dma.done [#allocation3], 16
    $region17: #{madacos_forward.7} parent=1 // pred_fallthru
      _
    %26 = sfence
    %s27 = sld [smem:[#allocation2]]
    %s28 = sld [smem:[#allocation2 + $0x1]]
    %v29 = vld [vmem:[%s2] sm:$0xf]
    %v30 = vld [vmem:[%s2 + $0x4] sm:$0xf]
    %v31 = vld [vmem:[%s2 + $0x8] sm:$0xf]
    %v32 = vld [vmem:[%s2 + $0xc] sm:$0xf]
    %v33 = vld [vmem:[%s2 + $0x10] sm:$0xf]
    %v34 = vld [vmem:[%s2 + $0x14] sm:$0xf]
    %v35 = vld [vmem:[%s2 + $0x18] sm:$0xf]
    %v36 = vld [vmem:[%s2 + $0x1c] sm:$0xf]
    %v37 = vld [vmem:[%s2 + $0x20] sm:$0xf]
    %v38 = vld [vmem:[%s2 + $0x24] sm:$0xf]
    %v39 = vld [vmem:[%s2 + $0x28] sm:$0xf]
    %v40 = vld [vmem:[%s2 + $0x2c] sm:$0xf]
    %v41 = vld [vmem:[%s2 + $0x30] sm:$0xf]
    %v42 = vld [vmem:[%s2 + $0x34] sm:$0xf]
    %v43 = vld [vmem:[%s2 + $0x38] sm:$0xf]
    %v44 = vld [vmem:[%s2 + $0x3c] sm:$0xf]
    %v45 = vunpack.c.l.bf16 %v29
    %v46 = vunpack.c.l.bf16 %v30
    %v47 = vunpack.c.l.bf16 %v31
    %v48 = vunpack.c.l.bf16 %v32
    %v49 = vunpack.c.l.bf16 %v33
    %v50 = vunpack.c.l.bf16 %v34
    %v51 = vunpack.c.l.bf16 %v35
    %v52 = vunpack.c.l.bf16 %v36
    %v53 = vunpack.c.l.bf16 %v37
    %v54 = vunpack.c.l.bf16 %v38
    %v55 = vunpack.c.l.bf16 %v39
    %v56 = vunpack.c.l.bf16 %v40
    %v57 = vunpack.c.l.bf16 %v41
    %v58 = vunpack.c.l.bf16 %v42
    %v59 = vunpack.c.l.bf16 %v43
    %v60 = vunpack.c.l.bf16 %v44
    %v61 = vlaneseq
    %v62 = vand.u32 %v61, 127
    %s63 = smul.u32 0, 128
    %v64 = vstv %s63
    %v65 = vadd.s32 %v62, %v64
    %v66 = vld [vmem:[%s1] sm:$0xff]
    %v67 = vld [vmem:[%s1 + $0x8] sm:$0xff]
    %v68 = vld [vmem:[%s1 + $0x10] sm:$0xff]
    %v69 = vld [vmem:[%s1 + $0x18] sm:$0xff]
    %v70 = vld [vmem:[%s1 + $0x20] sm:$0xff]
    %v71 = vld [vmem:[%s1 + $0x28] sm:$0xff]
    %v72 = vld [vmem:[%s1 + $0x30] sm:$0xff]
    %v73 = vld [vmem:[%s1 + $0x38] sm:$0xff]
    %v74 = vld [vmem:[%s1 + $0x40] sm:$0xff]
    %v75 = vld [vmem:[%s1 + $0x48] sm:$0xff]
    %v76 = vld [vmem:[%s1 + $0x50] sm:$0xff]
    %v77 = vld [vmem:[%s1 + $0x58] sm:$0xff]
    %v78 = vld [vmem:[%s1 + $0x60] sm:$0xff]
    %v79 = vld [vmem:[%s1 + $0x68] sm:$0xff]
    %v80 = vld [vmem:[%s1 + $0x70] sm:$0xff]
    %v81 = vld [vmem:[%s1 + $0x78] sm:$0xff]
    %82 = vset.pattern.permute.xlu0 0
    %83 = vperm.xlu0 %82, %v66
    %v84 = vpop.permute.xlu0 %83
    %85 = vset.pattern.permute.xlu0 0
    %86 = vperm.xlu0 %85, %v67
    %v87 = vpop.permute.xlu0 %86
    %88 = vset.pattern.permute.xlu0 0
    %89 = vperm.xlu0 %88, %v68
    %v90 = vpop.permute.xlu0 %89
    %91 = vset.pattern.permute.xlu0 0
    %92 = vperm.xlu0 %91, %v69
    %v93 = vpop.permute.xlu0 %92
    %94 = vset.pattern.permute.xlu0 0
    %95 = vperm.xlu0 %94, %v70
    %v96 = vpop.permute.xlu0 %95
    %97 = vset.pattern.permute.xlu0 0
    %98 = vperm.xlu0 %97, %v71
    %v99 = vpop.permute.xlu0 %98
    %100 = vset.pattern.permute.xlu0 0
    %101 = vperm.xlu0 %100, %v72
    %v102 = vpop.permute.xlu0 %101
    %103 = vset.pattern.permute.xlu0 0
    %104 = vperm.xlu0 %103, %v73
    %v105 = vpop.permute.xlu0 %104
    %106 = vset.pattern.permute.xlu0 0
    %107 = vperm.xlu0 %106, %v74
    %v108 = vpop.permute.xlu0 %107
    %109 = vset.pattern.permute.xlu0 0
    %110 = vperm.xlu0 %109, %v75
    %v111 = vpop.permute.xlu0 %110
    %112 = vset.pattern.permute.xlu0 0
    %113 = vperm.xlu0 %112, %v76
    %v114 = vpop.permute.xlu0 %113
    %115 = vset.pattern.permute.xlu0 0
    %116 = vperm.xlu0 %115, %v77
    %v117 = vpop.permute.xlu0 %116
    %118 = vset.pattern.permute.xlu0 0
    %119 = vperm.xlu0 %118, %v78
    %v120 = vpop.permute.xlu0 %119
    %121 = vset.pattern.permute.xlu0 0
    %122 = vperm.xlu0 %121, %v79
    %v123 = vpop.permute.xlu0 %122
    %124 = vset.pattern.permute.xlu0 0
    %125 = vperm.xlu0 %124, %v80
    %v126 = vpop.permute.xlu0 %125
    %127 = vset.pattern.permute.xlu0 0
    %128 = vperm.xlu0 %127, %v81
    %v129 = vpop.permute.xlu0 %128
    %vm130 = vcmp.eq.s32.totalorder %v65, %v84
    %vm131 = vcmp.eq.s32.totalorder %v65, %v87
    %vm132 = vcmp.eq.s32.totalorder %v65, %v90
    %vm133 = vcmp.eq.s32.totalorder %v65, %v93
    %vm134 = vcmp.eq.s32.totalorder %v65, %v96
    %vm135 = vcmp.eq.s32.totalorder %v65, %v99
    %vm136 = vcmp.eq.s32.totalorder %v65, %v102
    %vm137 = vcmp.eq.s32.totalorder %v65, %v105
    %vm138 = vcmp.eq.s32.totalorder %v65, %v108
    %vm139 = vcmp.eq.s32.totalorder %v65, %v111
    %vm140 = vcmp.eq.s32.totalorder %v65, %v114
    %vm141 = vcmp.eq.s32.totalorder %v65, %v117
    %vm142 = vcmp.eq.s32.totalorder %v65, %v120
    %vm143 = vcmp.eq.s32.totalorder %v65, %v123
    %vm144 = vcmp.eq.s32.totalorder %v65, %v126
    %vm145 = vcmp.eq.s32.totalorder %v65, %v129
    %v146 = vstv %s27
    %v147 = vmul.f32 %v45, %v146
    %v148 = vmul.f32 %v46, %v146
    %v149 = vmul.f32 %v47, %v146
    %v150 = vmul.f32 %v48, %v146
    %v151 = vmul.f32 %v49, %v146
    %v152 = vmul.f32 %v50, %v146
    %v153 = vmul.f32 %v51, %v146
    %v154 = vmul.f32 %v52, %v146
    %v155 = vmul.f32 %v53, %v146
    %v156 = vmul.f32 %v54, %v146
    %v157 = vmul.f32 %v55, %v146
    %v158 = vmul.f32 %v56, %v146
    %v159 = vmul.f32 %v57, %v146
    %v160 = vmul.f32 %v58, %v146
    %v161 = vmul.f32 %v59, %v146
    %v162 = vmul.f32 %v60, %v146
    %v163 = vstv %s28
    %v164 = vsub.f32 %v147, %v163
    %v165 = vsub.f32 %v148, %v163
    %v166 = vsub.f32 %v149, %v163
    %v167 = vsub.f32 %v150, %v163
    %v168 = vsub.f32 %v151, %v163
    %v169 = vsub.f32 %v152, %v163
    %v170 = vsub.f32 %v153, %v163
    %v171 = vsub.f32 %v154, %v163
    %v172 = vsub.f32 %v155, %v163
    %v173 = vsub.f32 %v156, %v163
    %v174 = vsub.f32 %v157, %v163
    %v175 = vsub.f32 %v158, %v163
    %v176 = vsub.f32 %v159, %v163
    %v177 = vsub.f32 %v160, %v163
    %v178 = vsub.f32 %v161, %v163
    %v179 = vsub.f32 %v162, %v163
    %v180 = vsel %vm130, %v164, %v147
    %v181 = vsel %vm131, %v165, %v148
    %v182 = vsel %vm132, %v166, %v149
    %v183 = vsel %vm133, %v167, %v150
    %v184 = vsel %vm134, %v168, %v151
    %v185 = vsel %vm135, %v169, %v152
    %v186 = vsel %vm136, %v170, %v153
    %v187 = vsel %vm137, %v171, %v154
    %v188 = vsel %vm138, %v172, %v155
    %v189 = vsel %vm139, %v173, %v156
    %v190 = vsel %vm140, %v174, %v157
    %v191 = vsel %vm141, %v175, %v158
    %v192 = vsel %vm142, %v176, %v159
    %v193 = vsel %vm143, %v177, %v160
    %v194 = vsel %vm144, %v178, %v161
    %v195 = vsel %vm145, %v179, %v162
    %196 = vst [vmem:[%s3] sm:$0xff] %v180
    %197 = vst [vmem:[%s3 + $0x8] sm:$0xff] %v181
    %198 = vst [vmem:[%s3 + $0x10] sm:$0xff] %v182
    %199 = vst [vmem:[%s3 + $0x18] sm:$0xff] %v183
    %200 = vst [vmem:[%s3 + $0x20] sm:$0xff] %v184
    %201 = vst [vmem:[%s3 + $0x28] sm:$0xff] %v185
    %202 = vst [vmem:[%s3 + $0x30] sm:$0xff] %v186
    %203 = vst [vmem:[%s3 + $0x38] sm:$0xff] %v187
    %204 = vst [vmem:[%s3 + $0x40] sm:$0xff] %v188
    %205 = vst [vmem:[%s3 + $0x48] sm:$0xff] %v189
    %206 = vst [vmem:[%s3 + $0x50] sm:$0xff] %v190
    %207 = vst [vmem:[%s3 + $0x58] sm:$0xff] %v191
    %208 = vst [vmem:[%s3 + $0x60] sm:$0xff] %v192
    %209 = vst [vmem:[%s3 + $0x68] sm:$0xff] %v193
    %210 = vst [vmem:[%s3 + $0x70] sm:$0xff] %v194
    %211 = vst [vmem:[%s3 + $0x78] sm:$0xff] %v195
    // Predicated region
    $region18: #{madacos_forward.7} parent=1 // pred_check
      _
    $region19: #{madacos_forward.7} parent=1 // pred_check_branch
      %213 = sbr.rel (0) target = $region21
    $region20: #{madacos_forward.7} parent=1 // pred_region
      _
    $region21: #{madacos_forward.7} parent=1 // pred_fallthru
      _
    // Predicated region
    $region22: #{madacos_forward.7} parent=1 // pred_check
      _
    $region23: #{madacos_forward.7} parent=1 // pred_check_branch
      %215 = sbr.rel (0) target = $region25
    $region24: #{madacos_forward.7} parent=1 // pred_region
      _
    $region25: #{madacos_forward.7} parent=1 // pred_fallthru
      _
    %216 = vsyncpa [#allocation3], 1

</llo_original>
